<compile_context>
chip_gen: v6e
topology: v6e:2x2x1
jax: 0.10.0
libtpu: 0.0.40
codegen_flags: <defaults>
</compile_context>

<pallas_src>
import math
import functools
import jax
import jax.numpy as jnp
from jax.experimental import pallas as pl
from jax.experimental.pallas import tpu as pltpu


def autopad(k, p=None, d=1):
    if d > 1:
        k = d * (k - 1) + 1
    if p is None:
        p = k // 2
    return p


def _round_up(a, b):
    return (a + b - 1) // b * b


# ------------------------- Pallas kernels -------------------------
# Grouped, K/N-tiled matmul + bias:
#   A: (G, Mp, K)   B: (G, K, Npad)   bias: (G, 1, Npad)
#   out: (Mp, G*Npad); optionally per-M-tile partial sum / sum-of-squares
#   (fused BatchNorm statistics) of shape (grid_m, 8, G*Npad) (row 0 real).
# Grid (G, grid_m, grid_n, grid_k).  program_id is only read at the kernel
# top level (never inside pl.when) and is skipped entirely when grid_k == 1.

def _make_mm_kernel(nk, with_stats, out_dtype):
    def epilogue(acc, bias_ref, o_ref, ps_ref, pq_ref):
        y = acc + bias_ref[...]
        o_ref[...] = y.astype(out_dtype)
        if with_stats:
            # Fused BatchNorm batch statistics (f32). Padded-M rows are
            # corrected outside the kernel (they contribute exactly `bias`).
            s = jnp.sum(y, axis=0, keepdims=True)
            q = jnp.sum(y * y, axis=0, keepdims=True)
            ps_ref[...] = jnp.broadcast_to(s, ps_ref.shape)
            pq_ref[...] = jnp.broadcast_to(q, pq_ref.shape)

    if nk == 1:
        # Single reduction step: no accumulator scratch, no control flow.
        def kernel(a_ref, b_ref, bias_ref, o_ref, *rest):
            ps_ref, pq_ref = rest if with_stats else (None, None)
            acc = jnp.dot(a_ref[...], b_ref[...],
                          preferred_element_type=jnp.float32)
            epilogue(acc, bias_ref, o_ref, ps_ref, pq_ref)
        return kernel

    def kernel(a_ref, b_ref, bias_ref, o_ref, *rest):
        if with_stats:
            ps_ref, pq_ref, acc_ref = rest
        else:
            (acc_ref,) = rest
            ps_ref = pq_ref = None
        k = pl.program_id(3)          # top-level only (interpret-safe)

        @pl.when(k == 0)
        def _():
            acc_ref[...] = jnp.zeros_like(acc_ref)

        acc_ref[...] += jnp.dot(a_ref[...], b_ref[...],
                                preferred_element_type=jnp.float32)

        @pl.when(k == nk - 1)
        def _():
            epilogue(acc_ref[...], bias_ref, o_ref, ps_ref, pq_ref)

    return kernel


def grouped_matmul_bias(a, b, bias, *, tm, out_dtype=jnp.float32,
                        with_stats=False):
    """out[g] = A[g] @ B[g] + bias[g]; A:(G,Mp,K) B:(G,K,Npad) bias:(G,1,Npad)."""
    G, Mp, K = a.shape
    _, Kb, Npad = b.shape
    assert K == Kb and Mp % tm == 0 and Npad % 128 == 0

    # N tile: cover the whole padded output width (<=512) so the streamed A
    # operand is read from HBM only once; otherwise 512/256/128-wide tiles.
    if Npad <= 512:
        tn = Npad
    elif Npad % 512 == 0:
        tn = 512
    elif Npad % 256 == 0:
        tn = 256
    else:
        tn = 128

    # K tile: single pass for moderate K (pad large unaligned K up to a lane
    # friendly 128 multiple), else 512-deep reduction steps.
    if K <= 1024:
        if K >= 512 and K % 128 != 0:
            Kp = _round_up(K, 128)
            a = jnp.pad(a, ((0, 0), (0, 0), (0, Kp - K)))
            b = jnp.pad(b, ((0, 0), (0, Kp - K), (0, 0)))
            K = Kp
        tk = K
    else:
        tk = 512
        Kp = _round_up(K, tk)
        if Kp != K:
            a = jnp.pad(a, ((0, 0), (0, 0), (0, Kp - K)))
            b = jnp.pad(b, ((0, 0), (0, Kp - K), (0, 0)))
            K = Kp

    grid_m, grid_n, grid_k = Mp // tm, Npad // tn, K // tk
    nj = grid_n

    # vmem limit derived from the actual tile footprint (double-buffered
    # inputs/outputs + accumulator), clamped for v7x's 64 MiB VMEM.
    a_bytes = jnp.dtype(a.dtype).itemsize
    b_bytes = jnp.dtype(b.dtype).itemsize
    o_bytes = jnp.dtype(out_dtype).itemsize
    vmem_est = 2 * (tm * tk * a_bytes + tk * tn * b_bytes
                    + tm * tn * o_bytes + tn * 4)
    if with_stats:
        vmem_est += 2 * 2 * 8 * tn * 4
    if grid_k > 1:
        vmem_est += tm * tn * 4
    vmem_limit = int(min(max(2 * vmem_est, 8 * 1024 * 1024), 48 * 1024 * 1024))

    in_specs = [
        pl.BlockSpec((None, tm, tk), lambda g, i, j, k: (g, i, k)),
        pl.BlockSpec((None, tk, tn), lambda g, i, j, k: (g, k, j)),
        pl.BlockSpec((None, 1, tn), lambda g, i, j, k: (g, 0, j)),
    ]
    out_shape = [jax.ShapeDtypeStruct((Mp, G * Npad), out_dtype)]
    out_specs = [pl.BlockSpec((tm, tn), lambda g, i, j, k: (i, g * nj + j))]
    if with_stats:
        st_spec = pl.BlockSpec((None, 8, tn),
                               lambda g, i, j, k: (i, 0, g * nj + j))
        out_shape += [jax.ShapeDtypeStruct((grid_m, 8, G * Npad),
                                           jnp.float32)] * 2
        out_specs += [st_spec, st_spec]

    scratch = [pltpu.VMEM((tm, tn), jnp.float32)] if grid_k > 1 else []

    res = pl.pallas_call(
        _make_mm_kernel(grid_k, with_stats, out_dtype),
        out_shape=tuple(out_shape),
        grid=(G, grid_m, grid_n, grid_k),
        in_specs=in_specs,
        out_specs=tuple(out_specs),
        scratch_shapes=scratch,
        compiler_params=pltpu.CompilerParams(
            dimension_semantics=("parallel", "parallel", "parallel",
                                 "arbitrary"),
            vmem_limit_bytes=vmem_limit),
    )(a, b, bias.astype(jnp.float32))
    return res if with_stats else res[0]


def _bn_silu_kernel(y_ref, sc_ref, sh_ref, o_ref):
    z = y_ref[...].astype(jnp.float32) * sc_ref[...] + sh_ref[...]
    # Exact SiLU(z) = z * sigmoid(z)  (no approx reciprocal: fp32 parity).
    o_ref[...] = (z * (1.0 / (1.0 + jnp.exp(-z)))).astype(o_ref.dtype)


def bn_silu(y, scale, shift, out_dtype=jnp.float32):
    Mp, C = y.shape
    tm = next(t for t in (1024, 512, 256, 128, Mp) if Mp % t == 0)
    tn = next(t for t in (512, 256, 128, C) if C % t == 0)
    ebytes = jnp.dtype(y.dtype).itemsize
    obytes = jnp.dtype(out_dtype).itemsize
    est = 2 * (tm * tn * (ebytes + obytes) + 2 * tn * 4)
    vmem_limit = int(min(max(2 * est, 8 * 1024 * 1024), 48 * 1024 * 1024))
    return pl.pallas_call(
        _bn_silu_kernel,
        out_shape=jax.ShapeDtypeStruct((Mp, C), out_dtype),
        grid=(Mp // tm, C // tn),
        in_specs=[
            pl.BlockSpec((tm, tn), lambda i, j: (i, j)),
            pl.BlockSpec((1, tn), lambda i, j: (0, j)),
            pl.BlockSpec((1, tn), lambda i, j: (0, j)),
        ],
        out_specs=pl.BlockSpec((tm, tn), lambda i, j: (i, j)),
        compiler_params=pltpu.CompilerParams(
            dimension_semantics=("parallel", "parallel"),
            vmem_limit_bytes=vmem_limit),
    )(y, scale.reshape(1, C).astype(jnp.float32),
      shift.reshape(1, C).astype(jnp.float32))


# ------------------------- forward (glue + kernels) -------------------------

def dcnv2_forward(x, params, *, stride=1, dilation=1, groups=1,
                  deformable_groups=1, eps=1e-5):
    weight = params["weight"]          # (Cout, Cin//groups, kh, kw)
    bias = params["bias"]              # (Cout,)
    w_off = params["w_off"]            # (3*dg*kh*kw, Cin, kh, kw)
    b_off = params["b_off"]            # (3*dg*kh*kw,)
    gamma, beta = params["gamma"], params["beta"]

    N, Cin, H, W = x.shape
    Cout = weight.shape[0]
    kh, kw = weight.shape[2], weight.shape[3]
    KK = kh * kw
    pad = autopad(kh, None, dilation)
    Ho = (H + 2 * pad - dilation * (kh - 1) - 1) // stride + 1
    Wo = (W + 2 * pad - dilation * (kw - 1) - 1) // stride + 1
    M = N * Ho * Wo
    L = Ho * Wo * KK
    dg = deformable_groups
    Cg_dg = Cin // dg
    Cg_in = Cin // groups
    Cg_out = Cout // groups

    x = x.astype(jnp.float32)
    x_nhwc = x.transpose(0, 2, 3, 1)                           # (N, H, W, Cin)

    # M tile: biggest of 512/256/128 that divides M while keeping >= 2 tiles
    # for v7x megacore balance; else the biggest exact divisor; else pad.
    tm = None
    for t in (512, 256, 128):
        if M % t == 0 and M // t >= 2:
            tm = t
            break
    if tm is None:
        for t in (512, 256, 128):
            if M % t == 0:
                tm = t
                break
    if tm is None:
        tm = 256 if M >= 256 else _round_up(M, 16)
    Mp = _round_up(M, tm)

    # ---- 1) conv_offset_mask: im2col in token layout (K order = (kk, c)) +
    #          Pallas MXU matmul.  bf16 operands, f32 accumulate; result kept
    #          f32 (it feeds floor()/index math for the sampling grid).
    xp = jnp.pad(x_nhwc, ((0, 0), (pad, pad), (pad, pad), (0, 0)))
    pats = []
    for i in range(kh):
        for j in range(kw):
            pats.append(xp[:, i:i + stride * (Ho - 1) + 1:stride,
                           j:j + stride * (Wo - 1) + 1:stride, :])
    patches = jnp.stack(pats, axis=3)                          # (N,Ho,Wo,KK,Cin)
    patches = patches.reshape(1, M, KK * Cin).astype(jnp.bfloat16)
    if Mp != M:
        patches = jnp.pad(patches, ((0, 0), (0, Mp - M), (0, 0)))

    Co_off = 3 * dg * KK
    Np_off = _round_up(Co_off, 128)                            # lane-dense out
    w_off_mat = (w_off.reshape(Co_off, Cin, KK).transpose(2, 1, 0)
                 .reshape(1, KK * Cin, Co_off))
    w_off_mat = jnp.pad(w_off_mat,
                        ((0, 0), (0, 0), (0, Np_off - Co_off))).astype(jnp.bfloat16)
    b_off_p = jnp.pad(b_off, (0, Np_off - Co_off)).reshape(1, 1, Np_off)
    om = grouped_matmul_bias(patches, w_off_mat,
                             b_off_p.astype(jnp.float32),
                             tm=tm, out_dtype=jnp.float32, with_stats=False)
    om = om[:M, :Co_off].reshape(N, Ho, Wo, Co_off)

    # ---- 2) split into offsets (cat(o1, o2), interleaved (y, x)) and mask ----
    o1 = om[..., :dg * KK]
    o2 = om[..., dg * KK:2 * dg * KK]
    mlog = om[..., 2 * dg * KK:]
    offset = jnp.concatenate([o1, o2], axis=-1).reshape(N, Ho, Wo, dg, KK, 2)
    off_y = offset[..., 0]
    off_x = offset[..., 1]
    mask = jax.nn.sigmoid(mlog).reshape(N, Ho, Wo, dg, KK)

    base_y = (jnp.arange(Ho, dtype=jnp.float32)[:, None] * stride - pad
              + jnp.arange(kh, dtype=jnp.float32)[None, :] * dilation)
    base_x = (jnp.arange(Wo, dtype=jnp.float32)[:, None] * stride - pad
              + jnp.arange(kw, dtype=jnp.float32)[None, :] * dilation)
    base_py = jnp.broadcast_to(base_y[:, None, :, None],
                               (Ho, Wo, kh, kw)).reshape(Ho, Wo, KK)
    base_px = jnp.broadcast_to(base_x[None, :, None, :],
                               (Ho, Wo, kh, kw)).reshape(Ho, Wo, KK)
    py = base_py[None, :, :, None, :] + off_y                  # (N,Ho,Wo,dg,KK)
    px = base_px[None, :, :, None, :] + off_x

    # ---- 3) modulated bilinear sampling (torchvision deform_conv2d rules),
    #          channels-last so the result is already in token layout ----
    # TODO(synk): data-dependent bilinear gather stays in JAX glue (a Pallas
    # gather kernel with pl.ANY + manual DMA would remove the cols
    # intermediate; not done here).
    valid = ((py > -1.0) & (py < H) & (px > -1.0) & (px < W)).astype(jnp.float32)
    y0 = jnp.floor(py); x0 = jnp.floor(px)
    y1 = y0 + 1.0;      x1 = x0 + 1.0
    ly = py - y0; lx = px - x0; hy = 1.0 - ly; hx = 1.0 - lx
    w_ll = hy * hx * (y0 >= 0) * (x0 >= 0)
    w_lh = hy * lx * (y0 >= 0) * (x1 <= W - 1)
    w_hl = ly * hx * (y1 <= H - 1) * (x0 >= 0)
    w_hh = ly * lx * (y1 <= H - 1) * (x1 <= W - 1)
    y0c = jnp.clip(y0, 0, H - 1).astype(jnp.int32)
    y1c = jnp.clip(y1, 0, H - 1).astype(jnp.int32)
    x0c = jnp.clip(x0, 0, W - 1).astype(jnp.int32)
    x1c = jnp.clip(x1, 0, W - 1).astype(jnp.int32)

    vm = valid * mask                                           # (N,Ho,Wo,dg,KK)
    # Per-corner weights (premultiplied by validity*mask) and indices; the 4
    # corner gathers are fused into a single gather over 4*L rows.
    wcorn = jnp.stack([w_ll, w_lh, w_hl, w_hh], axis=-1) * vm[..., None]
    icorn = jnp.stack([y0c * W + x0c, y0c * W + x1c,
                       y1c * W + x0c, y1c * W + x1c], axis=-1)  # (N,Ho,Wo,dg,KK,4)

    x_flat = x_nhwc.reshape(N, H * W, Cin)
    cols_groups = []
    for g in range(dg):
        xg = x_flat[:, :, g * Cg_dg:(g + 1) * Cg_dg]            # (N, HW, Cg)
        idx = icorn[:, :, :, g, :, :].reshape(N, 4 * L)
        gat = jax.vmap(lambda im, ix: im[ix])(xg, idx)          # (N, 4L, Cg)
        gat = gat.reshape(N, L, 4, Cg_dg)
        wg = wcorn[:, :, :, g, :, :].reshape(N, L, 4, 1)
        val = jnp.sum(wg * gat, axis=2)                         # (N, L, Cg) f32
        cols_groups.append(val.astype(jnp.bfloat16))            # bf16 MXU operand
    cols = cols_groups[0] if dg == 1 else jnp.concatenate(cols_groups, axis=-1)
    # (N, L, Cin), row order (n, ho, wo, kk) -> (groups, Mp, KK*Cg_in)
    if groups == 1:
        cols = cols.reshape(1, M, KK * Cin)
    else:
        # TODO(synk): for groups > 1 this transpose is a full HBM pass; build
        # per-conv-group slabs directly inside the gather loop instead.
        cols = (cols.reshape(M, KK, groups, Cg_in).transpose(2, 0, 1, 3)
                .reshape(groups, M, KK * Cg_in))
    if Mp != M:
        cols = jnp.pad(cols, ((0, 0), (0, Mp - M), (0, 0)))

    # ---- 4) deformable conv: bf16 MXU matmul (f32 accumulate) with conv
    #          groups on the grid, fused BatchNorm statistics epilogue, and
    #          bf16 output y (only re-read by the BN+SiLU kernel) ----
    Npad = _round_up(Cg_out, 128)
    # TODO(synk): for grouped convs with Cg_out << 128 one could pack several
    # groups into one 128-lane tile instead of padding each group to 128.
    w_mat = (weight.reshape(groups, Cg_out, Cg_in, KK).transpose(0, 3, 2, 1)
             .reshape(groups, KK * Cg_in, Cg_out))
    w_mat = jnp.pad(w_mat, ((0, 0), (0, 0), (0, Npad - Cg_out))).astype(jnp.bfloat16)
    bias_p = jnp.pad(bias.reshape(groups, 1, Cg_out),
                     ((0, 0), (0, 0), (0, Npad - Cg_out))).astype(jnp.float32)
    y, ps, pq = grouped_matmul_bias(cols, w_mat, bias_p, tm=tm,
                                    out_dtype=jnp.bfloat16, with_stats=True)

    # ---- 5) BatchNorm2d (training-mode batch stats from fused f32 partial
    #          sums; exact correction for padded M rows) + SiLU kernel ----
    bias_flat = bias_p.reshape(-1)                              # (G*Npad,)
    n_pad_rows = Mp - M
    s1 = jnp.sum(ps[:, 0, :], axis=0) - n_pad_rows * bias_flat
    s2 = jnp.sum(pq[:, 0, :], axis=0) - n_pad_rows * bias_flat * bias_flat
    mean = s1 / M
    var = jnp.maximum(s2 / M - mean * mean, 0.0)
    gamma_p = jnp.pad(gamma.reshape(groups, Cg_out),
                      ((0, 0), (0, Npad - Cg_out))).reshape(-1)
    beta_p = jnp.pad(beta.reshape(groups, Cg_out),
                     ((0, 0), (0, Npad - Cg_out))).reshape(-1)
    scale = gamma_p / jnp.sqrt(var + eps)
    shift = beta_p - mean * scale
    out = bn_silu(y, scale, shift, out_dtype=jnp.float32)       # (Mp, G*Npad)

    out = out[:M].reshape(N, Ho, Wo, groups, Npad)[..., :Cg_out]
    out = out.reshape(N, Ho, Wo, Cout).transpose(0, 3, 1, 2)    # NCHW
    return out


if __name__ == "__main__":
    key = jax.random.PRNGKey(0)
    N, Cin, H, W = 2, 4, 16, 16
    Cout, ksz, dg = 8, 3, 1
    KK = ksz * ksz
    k1, k2, k3, k4 = jax.random.split(key, 4)

    std = 1.0 / math.sqrt(Cin * KK)
    params = dict(
        # main weight: uniform(-std, std), bias zero (as in reset_parameters)
        weight=jax.random.uniform(k1, (Cout, Cin, ksz, ksz), jnp.float32, -std, std),
        bias=jnp.zeros((Cout,), jnp.float32),
        # reset_parameters zeroes conv_offset_mask; use small deterministic
        # nonzero values so the deformable sampling path is actually exercised.
        w_off=0.05 * jax.random.normal(k2, (3 * dg * KK, Cin, ksz, ksz), jnp.float32),
        b_off=0.05 * jax.random.normal(k3, (3 * dg * KK,), jnp.float32),
        gamma=jnp.ones((Cout,), jnp.float32),
        beta=jnp.zeros((Cout,), jnp.float32),
    )
    x = jax.random.normal(k4, (N, Cin, H, W), jnp.float32)

    fwd = jax.jit(functools.partial(dcnv2_forward, stride=1, dilation=1,
                                    groups=1, deformable_groups=dg))
    out = fwd(x, params)
    out = jax.block_until_ready(out)
    assert out.shape == (N, Cout, H, W), out.shape
    assert bool(jnp.all(jnp.isfinite(out)))
    print("KERNEL_OK")
</pallas_src>

<mosaic_0001>
module attributes {stable_mosaic.version = 11 : i64} {
  func.func @kernel(%arg0: i32, %arg1: i32, %arg2: i32, %arg3: i32, %arg4: memref<1x256x36xbf16, #tpu.memory_space<vmem>>, %arg5: memref<1x36x128xbf16, #tpu.memory_space<vmem>>, %arg6: memref<1x1x128xf32, #tpu.memory_space<vmem>>, %arg7: memref<256x128xf32, #tpu.memory_space<vmem>>) attributes {dimension_semantics = [#tpu.dimension_semantics<parallel>, #tpu.dimension_semantics<parallel>, #tpu.dimension_semantics<parallel>, #tpu.dimension_semantics<arbitrary>], iteration_bounds = array<i64: 1, 2, 1, 1>, scalar_prefetch = 0 : i64, scratch_operands = 0 : i64, tpu.core_type = #tpu.core_type<tc>, window_params = [{transform_indices = @transform_0, window_bounds = array<i64: 1, 256, 36>}, {transform_indices = @transform_1, window_bounds = array<i64: 1, 36, 128>}, {transform_indices = @transform_2, window_bounds = array<i64: 1, 1, 128>}, {transform_indices = @transform_3, window_bounds = array<i64: 256, 128>}]} {
    %c0 = arith.constant 0 : index
    %c0_0 = arith.constant 0 : index
    %c0_1 = arith.constant 0 : index
    %0 = vector.load %arg4[%c0, %c0_0, %c0_1] : memref<1x256x36xbf16, #tpu.memory_space<vmem>>, vector<1x256x36xbf16>
    %1 = vector.shape_cast %0 : vector<1x256x36xbf16> to vector<256x36xbf16>
    %c0_2 = arith.constant 0 : index
    %c0_3 = arith.constant 0 : index
    %c0_4 = arith.constant 0 : index
    %2 = vector.load %arg5[%c0_2, %c0_3, %c0_4] : memref<1x36x128xbf16, #tpu.memory_space<vmem>>, vector<1x36x128xbf16>
    %3 = vector.shape_cast %2 : vector<1x36x128xbf16> to vector<36x128xbf16>
    %cst = arith.constant dense<0.000000e+00> : vector<256x128xf32>
    %4 = tpu.matmul %1, %3, %cst {dimension_numbers = #tpu.dot_dimension_numbers<[1], [0], [0], [1], [0, 0, 1, 1], [], []>} : vector<256x36xbf16>, vector<36x128xbf16>, vector<256x128xf32> -> vector<256x128xf32>
    %c0_5 = arith.constant 0 : index
    %c0_6 = arith.constant 0 : index
    %c0_7 = arith.constant 0 : index
    %5 = vector.load %arg6[%c0_5, %c0_6, %c0_7] : memref<1x1x128xf32, #tpu.memory_space<vmem>>, vector<1x1x128xf32>
    %6 = vector.shape_cast %5 : vector<1x1x128xf32> to vector<1x128xf32>
    %7 = vector.broadcast %6 : vector<1x128xf32> to vector<256x128xf32>
    %8 = arith.addf %4, %7 : vector<256x128xf32>
    %c0_8 = arith.constant 0 : index
    %c0_9 = arith.constant 0 : index
    %9 = vector.load %arg7[%c0_8, %c0_9] : memref<256x128xf32, #tpu.memory_space<vmem>>, vector<256x128xf32>
    tpu.vector_store %arg7[%c0_8, %c0_9], %8 {strides = array<i32>} : memref<256x128xf32, #tpu.memory_space<vmem>>, vector<256x128xf32>,
    return
  }
  func.func @transform_0(%arg0: i32, %arg1: i32, %arg2: i32, %arg3: i32) -> (i32, i32, i32) {
    %c0_i32 = arith.constant 0 : i32
    return %arg0, %arg1, %arg3 : i32, i32, i32
  }
  func.func @transform_1(%arg0: i32, %arg1: i32, %arg2: i32, %arg3: i32) -> (i32, i32, i32) {
    %c0_i32 = arith.constant 0 : i32
    return %arg0, %arg3, %arg2 : i32, i32, i32
  }
  func.func @transform_2(%arg0: i32, %arg1: i32, %arg2: i32, %arg3: i32) -> (i32, i32, i32) {
    %c0_i32 = arith.constant 0 : i32
    %c0_i32_0 = arith.constant 0 : i32
    return %arg0, %c0_i32, %arg2 : i32, i32, i32
  }
  func.func @transform_3(%arg0: i32, %arg1: i32, %arg2: i32, %arg3: i32) -> (i32, i32) {
    %c1_i32 = arith.constant 1 : i32
    %0 = arith.muli %arg0, %c1_i32 : i32
    %1 = arith.addi %0, %arg2 : i32
    %c0_i32 = arith.constant 0 : i32
    return %arg1, %1 : i32, i32
  }
}

module attributes {stable_mosaic.version = 11 : i64} {
  func.func @kernel(%arg0: i32, %arg1: i32, %arg2: i32, %arg3: i32, %arg4: memref<1x256x36xbf16, #tpu.memory_space<vmem>>, %arg5: memref<1x36x128xbf16, #tpu.memory_space<vmem>>, %arg6: memref<1x1x128xf32, #tpu.memory_space<vmem>>, %arg7: memref<256x128xbf16, #tpu.memory_space<vmem>>, %arg8: memref<1x8x128xf32, #tpu.memory_space<vmem>>, %arg9: memref<1x8x128xf32, #tpu.memory_space<vmem>>) attributes {dimension_semantics = [#tpu.dimension_semantics<parallel>, #tpu.dimension_semantics<parallel>, #tpu.dimension_semantics<parallel>, #tpu.dimension_semantics<arbitrary>], iteration_bounds = array<i64: 1, 2, 1, 1>, scalar_prefetch = 0 : i64, scratch_operands = 0 : i64, tpu.core_type = #tpu.core_type<tc>, window_params = [{transform_indices = @transform_0, window_bounds = array<i64: 1, 256, 36>}, {transform_indices = @transform_1, window_bounds = array<i64: 1, 36, 128>}, {transform_indices = @transform_2, window_bounds = array<i64: 1, 1, 128>}, {transform_indices = @transform_3, window_bounds = array<i64: 256, 128>}, {transform_indices = @transform_4, window_bounds = array<i64: 1, 8, 128>}, {transform_indices = @transform_5, window_bounds = array<i64: 1, 8, 128>}]} {
    %c0 = arith.constant 0 : index
    %c0_0 = arith.constant 0 : index
    %c0_1 = arith.constant 0 : index
    %0 = vector.load %arg4[%c0, %c0_0, %c0_1] : memref<1x256x36xbf16, #tpu.memory_space<vmem>>, vector<1x256x36xbf16>
    %1 = vector.shape_cast %0 : vector<1x256x36xbf16> to vector<256x36xbf16>
    %c0_2 = arith.constant 0 : index
    %c0_3 = arith.constant 0 : index
    %c0_4 = arith.constant 0 : index
    %2 = vector.load %arg5[%c0_2, %c0_3, %c0_4] : memref<1x36x128xbf16, #tpu.memory_space<vmem>>, vector<1x36x128xbf16>
    %3 = vector.shape_cast %2 : vector<1x36x128xbf16> to vector<36x128xbf16>
    %cst = arith.constant dense<0.000000e+00> : vector<256x128xf32>
    %4 = tpu.matmul %1, %3, %cst {dimension_numbers = #tpu.dot_dimension_numbers<[1], [0], [0], [1], [0, 0, 1, 1], [], []>} : vector<256x36xbf16>, vector<36x128xbf16>, vector<256x128xf32> -> vector<256x128xf32>
    %c0_5 = arith.constant 0 : index
    %c0_6 = arith.constant 0 : index
    %c0_7 = arith.constant 0 : index
    %5 = vector.load %arg6[%c0_5, %c0_6, %c0_7] : memref<1x1x128xf32, #tpu.memory_space<vmem>>, vector<1x1x128xf32>
    %6 = vector.shape_cast %5 : vector<1x1x128xf32> to vector<1x128xf32>
    %7 = vector.broadcast %6 : vector<1x128xf32> to vector<256x128xf32>
    %8 = arith.addf %4, %7 : vector<256x128xf32>
    %9 = arith.truncf %8 : vector<256x128xf32> to vector<256x128xbf16>
    %c0_8 = arith.constant 0 : index
    %c0_9 = arith.constant 0 : index
    %10 = vector.load %arg7[%c0_8, %c0_9] : memref<256x128xbf16, #tpu.memory_space<vmem>>, vector<256x128xbf16>
    tpu.vector_store %arg7[%c0_8, %c0_9], %9 {strides = array<i32>} : memref<256x128xbf16, #tpu.memory_space<vmem>>, vector<256x128xbf16>,
    %cst_10 = arith.constant dense<0.000000e+00> : vector<128xf32>
    %11 = vector.multi_reduction <add>, %8, %cst_10 [0] : vector<256x128xf32> to vector<128xf32>
    %12 = vector.shape_cast %11 : vector<128xf32> to vector<1x128xf32>
    %13 = arith.mulf %8, %8 : vector<256x128xf32>
    %cst_11 = arith.constant dense<0.000000e+00> : vector<128xf32>
    %14 = vector.multi_reduction <add>, %13, %cst_11 [0] : vector<256x128xf32> to vector<128xf32>
    %15 = vector.shape_cast %14 : vector<128xf32> to vector<1x128xf32>
    %16 = vector.shape_cast %12 : vector<1x128xf32> to vector<1x128xf32>
    %17 = vector.broadcast %16 : vector<1x128xf32> to vector<8x128xf32>
    %c0_12 = arith.constant 0 : index
    %c0_13 = arith.constant 0 : index
    %c0_14 = arith.constant 0 : index
    %18 = vector.load %arg8[%c0_12, %c0_13, %c0_14] : memref<1x8x128xf32, #tpu.memory_space<vmem>>, vector<1x8x128xf32>
    %19 = vector.shape_cast %18 : vector<1x8x128xf32> to vector<8x128xf32>
    %20 = vector.shape_cast %17 : vector<8x128xf32> to vector<1x8x128xf32>
    tpu.vector_store %arg8[%c0_12, %c0_13, %c0_14], %20 {strides = array<i32>} : memref<1x8x128xf32, #tpu.memory_space<vmem>>, vector<1x8x128xf32>,
    %21 = vector.shape_cast %15 : vector<1x128xf32> to vector<1x128xf32>
    %22 = vector.broadcast %21 : vector<1x128xf32> to vector<8x128xf32>
    %c0_15 = arith.constant 0 : index
    %c0_16 = arith.constant 0 : index
    %c0_17 = arith.constant 0 : index
    %23 = vector.load %arg9[%c0_15, %c0_16, %c0_17] : memref<1x8x128xf32, #tpu.memory_space<vmem>>, vector<1x8x128xf32>
    %24 = vector.shape_cast %23 : vector<1x8x128xf32> to vector<8x128xf32>
    %25 = vector.shape_cast %22 : vector<8x128xf32> to vector<1x8x128xf32>
    tpu.vector_store %arg9[%c0_15, %c0_16, %c0_17], %25 {strides = array<i32>} : memref<1x8x128xf32, #tpu.memory_space<vmem>>, vector<1x8x128xf32>,
    return
  }
  func.func @transform_0(%arg0: i32, %arg1: i32, %arg2: i32, %arg3: i32) -> (i32, i32, i32) {
    %c0_i32 = arith.constant 0 : i32
    return %arg0, %arg1, %arg3 : i32, i32, i32
  }
  func.func @transform_1(%arg0: i32, %arg1: i32, %arg2: i32, %arg3: i32) -> (i32, i32, i32) {
    %c0_i32 = arith.constant 0 : i32
    return %arg0, %arg3, %arg2 : i32, i32, i32
  }
  func.func @transform_2(%arg0: i32, %arg1: i32, %arg2: i32, %arg3: i32) -> (i32, i32, i32) {
    %c0_i32 = arith.constant 0 : i32
    %c0_i32_0 = arith.constant 0 : i32
    return %arg0, %c0_i32, %arg2 : i32, i32, i32
  }
  func.func @transform_3(%arg0: i32, %arg1: i32, %arg2: i32, %arg3: i32) -> (i32, i32) {
    %c1_i32 = arith.constant 1 : i32
    %0 = arith.muli %arg0, %c1_i32 : i32
    %1 = arith.addi %0, %arg2 : i32
    %c0_i32 = arith.constant 0 : i32
    return %arg1, %1 : i32, i32
  }
  func.func @transform_4(%arg0: i32, %arg1: i32, %arg2: i32, %arg3: i32) -> (i32, i32, i32) {
    %c1_i32 = arith.constant 1 : i32
    %0 = arith.muli %arg0, %c1_i32 : i32
    %1 = arith.addi %0, %arg2 : i32
    %c0_i32 = arith.constant 0 : i32
    %c0_i32_0 = arith.constant 0 : i32
    return %arg1, %c0_i32, %1 : i32, i32, i32
  }
  func.func @transform_5(%arg0: i32, %arg1: i32, %arg2: i32, %arg3: i32) -> (i32, i32, i32) {
    %c1_i32 = arith.constant 1 : i32
    %0 = arith.muli %arg0, %c1_i32 : i32
    %1 = arith.addi %0, %arg2 : i32
    %c0_i32 = arith.constant 0 : i32
    %c0_i32_0 = arith.constant 0 : i32
    return %arg1, %c0_i32, %1 : i32, i32, i32
  }
}

module attributes {stable_mosaic.version = 11 : i64} {
  func.func @_bn_silu_kernel(%arg0: i32, %arg1: i32, %arg2: memref<512x128xbf16, #tpu.memory_space<vmem>>, %arg3: memref<1x128xf32, #tpu.memory_space<vmem>>, %arg4: memref<1x128xf32, #tpu.memory_space<vmem>>, %arg5: memref<512x128xf32, #tpu.memory_space<vmem>>) attributes {dimension_semantics = [#tpu.dimension_semantics<parallel>, #tpu.dimension_semantics<parallel>], iteration_bounds = array<i64: 1, 1>, scalar_prefetch = 0 : i64, scratch_operands = 0 : i64, tpu.core_type = #tpu.core_type<tc>, window_params = [{transform_indices = @transform_0, window_bounds = array<i64: 512, 128>}, {transform_indices = @transform_1, window_bounds = array<i64: 1, 128>}, {transform_indices = @transform_2, window_bounds = array<i64: 1, 128>}, {transform_indices = @transform_3, window_bounds = array<i64: 512, 128>}]} {
    %c0 = arith.constant 0 : index
    %c0_0 = arith.constant 0 : index
    %0 = vector.load %arg2[%c0, %c0_0] : memref<512x128xbf16, #tpu.memory_space<vmem>>, vector<512x128xbf16>
    %1 = arith.extf %0 : vector<512x128xbf16> to vector<512x128xf32>
    %c0_1 = arith.constant 0 : index
    %c0_2 = arith.constant 0 : index
    %2 = vector.load %arg3[%c0_1, %c0_2] : memref<1x128xf32, #tpu.memory_space<vmem>>, vector<1x128xf32>
    %3 = vector.broadcast %2 : vector<1x128xf32> to vector<512x128xf32>
    %4 = arith.mulf %1, %3 : vector<512x128xf32>
    %c0_3 = arith.constant 0 : index
    %c0_4 = arith.constant 0 : index
    %5 = vector.load %arg4[%c0_3, %c0_4] : memref<1x128xf32, #tpu.memory_space<vmem>>, vector<1x128xf32>
    %6 = vector.broadcast %5 : vector<1x128xf32> to vector<512x128xf32>
    %7 = arith.addf %4, %6 : vector<512x128xf32>
    %cst = arith.constant 0.000000e+00 : f32
    %8 = vector.broadcast %cst : f32 to vector<512x128xf32>
    %9 = arith.subf %8, %7 : vector<512x128xf32>
    %10 = math.exp %9 : vector<512x128xf32>
    %cst_5 = arith.constant 1.000000e+00 : f32
    %11 = vector.broadcast %cst_5 : f32 to vector<512x128xf32>
    %12 = arith.addf %11, %10 : vector<512x128xf32>
    %cst_6 = arith.constant 1.000000e+00 : f32
    %13 = vector.broadcast %cst_6 : f32 to vector<512x128xf32>
    %14 = arith.divf %13, %12 : vector<512x128xf32>
    %15 = arith.mulf %7, %14 : vector<512x128xf32>
    %c0_7 = arith.constant 0 : index
    %c0_8 = arith.constant 0 : index
    %16 = vector.load %arg5[%c0_7, %c0_8] : memref<512x128xf32, #tpu.memory_space<vmem>>, vector<512x128xf32>
    tpu.vector_store %arg5[%c0_7, %c0_8], %15 {strides = array<i32>} : memref<512x128xf32, #tpu.memory_space<vmem>>, vector<512x128xf32>,
    return
  }
  func.func @transform_0(%arg0: i32, %arg1: i32) -> (i32, i32) {
    %c0_i32 = arith.constant 0 : i32
    return %arg0, %arg1 : i32, i32
  }
  func.func @transform_1(%arg0: i32, %arg1: i32) -> (i32, i32) {
    %c0_i32 = arith.constant 0 : i32
    %c0_i32_0 = arith.constant 0 : i32
    return %c0_i32, %arg1 : i32, i32
  }
  func.func @transform_2(%arg0: i32, %arg1: i32) -> (i32, i32) {
    %c0_i32 = arith.constant 0 : i32
    %c0_i32_0 = arith.constant 0 : i32
    return %c0_i32, %arg1 : i32, i32
  }
  func.func @transform_3(%arg0: i32, %arg1: i32) -> (i32, i32) {
    %c0_i32 = arith.constant 0 : i32
    return %arg0, %arg1 : i32, i32
  }
}

</mosaic_0001>

<llo_original>
// kernel: dcnv2_forward.3
$region0: #{dcnv2_forward.3}
  #allocation0 [shape = 'u32[]', space=smem, size = 0x4, offset = 0x4, fixed_abs, tag = 'smem constant byte address 0x4 - core index']
  #allocation1 [shape = 'u32[144,128]{1,0:T(1,128)}', space=vmem, size = 0x12000, scoped, tag = 'internal scratch']
  %s0 = inlined_call_operand.vmem [shape: bf16[1,512,36], index: 0, kind: input, shape index: {}]
  %s1 = inlined_call_operand.vmem [shape: bf16[1,36,128], index: 1, kind: input, shape index: {}]
  %s2 = inlined_call_operand.vmem [shape: f32[1,1,128], index: 2, kind: input, shape index: {}]
  %s3 = inlined_call_operand.vmem [shape: f32[512,128], index: 3, kind: output, shape index: {}]
  %s4 = sld [smem:[#allocation0]]
  $region45: #{dcnv2_forward.3} parent=0
    _
  %s6 = ssub.s32 1, %s4
  %s7 = scalar_select 0, %s6, %s4
  loop: start=0, step=1, limit=4
  $region2: #{dcnv2_forward.3} parent=0 // loop_pre_header
    _
  $region3: #{dcnv2_forward.3} parent=0 // loop_header
    %s9 = sphi 0, %s13
    %p10 = scmp.ge.s32.totalorder %s9, 4
    %s16 = sphi 0, %s42
    %s17 = sphi 0, %s38
    %s18 = sphi 0, %s34
    %s19 = sphi 0, %s30
    %s20 = sphi 0, %s16
    %s21 = sphi 0, %s17
    %s22 = sphi 0, %s18
    %s23 = sphi 0, %s19
    %s24 = sphi 0, %s20
    %s25 = sphi 0, %s21
    %s26 = sphi 0, %s22
    %s27 = sphi 0, %s23
    %s49 = sphi 0, %s51
    %s52 = sphi 0, %s49
    %s53 = sphi 0, %s52
    %s69 = sphi 0, %s53
    %s79 = sphi 0, %s81
    %s82 = sphi 0, %s79
    %s83 = sphi 0, %s82
    %s99 = sphi 0, %s83
    %s107 = sphi 0, %s109
    %s110 = sphi 0, %s107
    %s111 = sphi 0, %s110
    %s127 = sphi 0, %s111
    %s137 = sphi 0, %s139
    %s140 = sphi 0, %s137
    %s141 = sphi 0, %s140
    %s157 = sphi 0, %s141
  $region4: #{dcnv2_forward.3} parent=0 // loop_header_branch
    %12 = sbr.rel (%p10) target = $region8
  $region5: #{dcnv2_forward.3} parent=0 // loop_body
    %s14 = ssub.s32 %s9, 1
    %s15 = ssub.s32 %s9, 2
    %s28 = sadd.s32 1, %s19
    %p29 = scmp.ge.s32.totalorder %s28, 1
    %s30 = scalar_select %p29, 0, %s28
    %s31 = sadd.s32 1, %s18
    %s32 = scalar_select %p29, %s31, %s18
    %p33 = scmp.ge.s32.totalorder %s32, 1
    %s34 = scalar_select %p33, 0, %s32
    %s35 = sadd.s32 1, %s17
    %s36 = scalar_select %p33, %s35, %s17
    %p37 = scmp.ge.s32.totalorder %s36, 2
    %s38 = scalar_select %p37, 0, %s36
    %s39 = sadd.s32 1, %s16
    %s40 = scalar_select %p37, %s39, %s16
    %p41 = scmp.ge.s32.totalorder %s40, 1
    %s42 = scalar_select %p41, 0, %s40
    %s43 = ssub.s32 %s16, %s42
    %s44 = ssub.s32 %s17, %s38
    %s45 = sor.u32 %s43, %s44
    %s46 = ssub.s32 %s19, %s30
    %s47 = sor.u32 %s45, %s46
    %p48 = scmp.eq.s32.totalorder %s47, 0
    %s50 = sadd.s32 %s49, 1
    %s51 = scalar_select %p48, %s49, %s50
    %p54 = pneg %p48
    %p55 = scmp.eq.s32.totalorder %s9, 1
    %p56 = por %p54, %p55
    %p57 = scmp.ne.s32.totalorder %s49, %s52
    %p58 = scmp.eq.s32.totalorder %s9, 0
    %p59 = por %p57, %p58
    %p60 = scmp.ne.s32.totalorder %s49, %s52
    %p61 = scmp.eq.s32.totalorder %s14, 1
    %p62 = por %p60, %p61
    %p63 = scmp.ne.s32.totalorder %s52, %s53
    %p64 = scmp.eq.s32.totalorder %s14, 0
    %p65 = por %p63, %p64
    %p66 = scmp.ne.s32.totalorder %s52, %s53
    %p67 = scmp.eq.s32.totalorder %s15, 1
    %p68 = por %p66, %p67
    %p70 = scmp.ne.s32.totalorder %s53, %s69
    %p71 = scmp.eq.s32.totalorder %s15, 0
    %p72 = por %p70, %p71
    %s73 = ssub.s32 %s16, %s42
    %s74 = ssub.s32 %s19, %s30
    %s75 = sor.u32 %s73, %s74
    %s76 = ssub.s32 %s18, %s34
    %s77 = sor.u32 %s75, %s76
    %p78 = scmp.eq.s32.totalorder %s77, 0
    %s80 = sadd.s32 %s79, 1
    %s81 = scalar_select %p78, %s79, %s80
    %p84 = pneg %p78
    %p85 = scmp.eq.s32.totalorder %s9, 1
    %p86 = por %p84, %p85
    %p87 = scmp.ne.s32.totalorder %s79, %s82
    %p88 = scmp.eq.s32.totalorder %s9, 0
    %p89 = por %p87, %p88
    %p90 = scmp.ne.s32.totalorder %s79, %s82
    %p91 = scmp.eq.s32.totalorder %s14, 1
    %p92 = por %p90, %p91
    %p93 = scmp.ne.s32.totalorder %s82, %s83
    %p94 = scmp.eq.s32.totalorder %s14, 0
    %p95 = por %p93, %p94
    %p96 = scmp.ne.s32.totalorder %s82, %s83
    %p97 = scmp.eq.s32.totalorder %s15, 1
    %p98 = por %p96, %p97
    %p100 = scmp.ne.s32.totalorder %s83, %s99
    %p101 = scmp.eq.s32.totalorder %s15, 0
    %p102 = por %p100, %p101
    %s103 = ssub.s32 %s16, %s42
    %s104 = ssub.s32 %s18, %s34
    %s105 = sor.u32 %s103, %s104
    %p106 = scmp.eq.s32.totalorder %s105, 0
    %s108 = sadd.s32 %s107, 1
    %s109 = scalar_select %p106, %s107, %s108
    %p112 = pneg %p106
    %p113 = scmp.eq.s32.totalorder %s9, 1
    %p114 = por %p112, %p113
    %p115 = scmp.ne.s32.totalorder %s107, %s110
    %p116 = scmp.eq.s32.totalorder %s9, 0
    %p117 = por %p115, %p116
    %p118 = scmp.ne.s32.totalorder %s107, %s110
    %p119 = scmp.eq.s32.totalorder %s14, 1
    %p120 = por %p118, %p119
    %p121 = scmp.ne.s32.totalorder %s110, %s111
    %p122 = scmp.eq.s32.totalorder %s14, 0
    %p123 = por %p121, %p122
    %p124 = scmp.ne.s32.totalorder %s110, %s111
    %p125 = scmp.eq.s32.totalorder %s15, 1
    %p126 = por %p124, %p125
    %p128 = scmp.ne.s32.totalorder %s111, %s127
    %p129 = scmp.eq.s32.totalorder %s15, 0
    %p130 = por %p128, %p129
    %s131 = sadd.s32 %s16, %s18
    %s132 = sadd.s32 %s42, %s34
    %s133 = ssub.s32 %s17, %s38
    %s134 = ssub.s32 %s131, %s132
    %s135 = sor.u32 %s133, %s134
    %p136 = scmp.eq.s32.totalorder %s135, 0
    %s138 = sadd.s32 %s137, 1
    %s139 = scalar_select %p136, %s137, %s138
    %p142 = pneg %p136
    %p143 = scmp.eq.s32.totalorder %s9, 1
    %p144 = por %p142, %p143
    %p145 = scmp.ne.s32.totalorder %s137, %s140
    %p146 = scmp.eq.s32.totalorder %s9, 0
    %p147 = por %p145, %p146
    %p148 = scmp.ne.s32.totalorder %s137, %s140
    %p149 = scmp.eq.s32.totalorder %s14, 1
    %p150 = por %p148, %p149
    %p151 = scmp.ne.s32.totalorder %s140, %s141
    %p152 = scmp.eq.s32.totalorder %s14, 0
    %p153 = por %p151, %p152
    %p154 = scmp.ne.s32.totalorder %s140, %s141
    %p155 = scmp.eq.s32.totalorder %s15, 1
    %p156 = por %p154, %p155
    %p158 = scmp.ne.s32.totalorder %s141, %s157
    %p159 = scmp.eq.s32.totalorder %s15, 0
    %p160 = por %p158, %p159
    %p161 = scmp.le.s32.totalorder 1, %s9
    %p162 = scmp.lt.s32.totalorder %s9, 3
    %p163 = pnand %p161, %p162
    %p164 = pneg %p163
    // Predicated region
    $region9: #{dcnv2_forward.3} parent=5 // pred_check
      _
    $region10: #{dcnv2_forward.3} parent=5 // pred_check_branch
      %166 = sbr.rel (%p163) target = $region12
    $region11: #{dcnv2_forward.3} parent=5 // pred_region
      %s167 = ssub.s32 %s9, 1
      // Predicated region
      $region13: #{dcnv2_forward.3} parent=11 // pred_check
        %p168 = pneg %p95
      $region14: #{dcnv2_forward.3} parent=11 // pred_check_branch
        %170 = sbr.rel (%p168) target = $region16
      $region15: #{dcnv2_forward.3} parent=11 // pred_region
        %s171 = smul.u32 5, %s23
        %p172 = scmp.lt.s32.totalorder %s20, 0
        %s173 = scalar_select %p172, %s20, 0
        %p174 = scmp.lt.s32.totalorder %s171, 4
        %s175 = scalar_select %p174, %s171, 4
        %p176 = scmp.lt.s32.totalorder %s22, 0
        %s177 = scalar_select %p176, %s22, 0
        %s178 = sadd.s32 %s177, %s175
        %s179 = smul.addr %s173, 5
        %s180 = sadd.s32 %s178, %s179
        %s181 = smul.addr %s180, 4
        %s182 = scalar_lea.vmem %s1, %s181
        %s183 = smul.u32 5, %s23
      $region16: #{dcnv2_forward.3} parent=11 // pred_fallthru
        _
      // Predicated region
      $region17: #{dcnv2_forward.3} parent=11 // pred_check
        %p184 = pneg %p123
      $region18: #{dcnv2_forward.3} parent=11 // pred_check_branch
        %186 = sbr.rel (%p184) target = $region20
      $region19: #{dcnv2_forward.3} parent=11 // pred_region
        %p187 = scmp.lt.s32.totalorder %s20, 0
        %s188 = scalar_select %p187, %s20, 0
        %p189 = scmp.lt.s32.totalorder %s22, 0
        %s190 = scalar_select %p189, %s22, 0
        %s191 = sadd.s32 %s190, %s188
        %s192 = scalar_lea.vmem %s2, %s191
      $region20: #{dcnv2_forward.3} parent=11 // pred_fallthru
        _
    $region12: #{dcnv2_forward.3} parent=5 // pred_fallthru
      _
    %p193 = scmp.lt.s32.totalorder %s9, 2
    // Predicated region
    $region21: #{dcnv2_forward.3} parent=5 // pred_check
      %p194 = pneg %p193
    $region22: #{dcnv2_forward.3} parent=5 // pred_check_branch
      %196 = sbr.rel (%p194) target = $region24
    $region23: #{dcnv2_forward.3} parent=5 // pred_region
      // Predicated region
      $region25: #{dcnv2_forward.3} parent=23 // pred_check
        %p197 = pneg %p59
      $region26: #{dcnv2_forward.3} parent=23 // pred_check_branch
        %199 = sbr.rel (%p197) target = $region28
      $region27: #{dcnv2_forward.3} parent=23 // pred_region
        %s200 = smul.u32 32, %s17
        %p201 = scmp.lt.s32.totalorder %s16, 0
        %s202 = scalar_select %p201, %s16, 0
        %p203 = scmp.lt.s32.totalorder %s200, 63
        %s204 = scalar_select %p203, %s200, 63
        %p205 = scmp.lt.s32.totalorder %s19, 0
        %s206 = scalar_select %p205, %s19, 0
        %s207 = sadd.s32 %s206, %s204
        %s208 = smul.addr %s202, 64
        %s209 = sadd.s32 %s207, %s208
        %s210 = smul.addr %s209, 4
        %s211 = scalar_lea.vmem %s0, %s210
        %s212 = smul.u32 32, %s17
      $region28: #{dcnv2_forward.3} parent=23 // pred_fallthru
        _
    $region24: #{dcnv2_forward.3} parent=5 // pred_fallthru
      _
    %p213 = scmp.le.s32.totalorder 1, %s9
    %p214 = scmp.lt.s32.totalorder %s9, 3
    %p215 = pnand %p213, %p214
    %p216 = pneg %p215
    // Predicated region
    $region29: #{dcnv2_forward.3} parent=5 // pred_check
      _
    $region30: #{dcnv2_forward.3} parent=5 // pred_check_branch
      %218 = sbr.rel (%p215) target = $region32
    $region31: #{dcnv2_forward.3} parent=5 // pred_region
      %s219 = ssub.s32 %s9, 1
      %s220 = smul.u32 32, %s21
      %p221 = scmp.lt.s32.totalorder %s20, 0
      %s222 = scalar_select %p221, %s20, 0
      %p223 = scmp.lt.s32.totalorder %s220, 63
      %s224 = scalar_select %p223, %s220, 63
      %p225 = scmp.lt.s32.totalorder %s23, 0
      %s226 = scalar_select %p225, %s23, 0
      %s227 = sadd.s32 %s226, %s224
      %s228 = smul.addr %s222, 64
      %s229 = sadd.s32 %s227, %s228
      %s230 = smul.addr %s229, 4
      %s231 = scalar_lea.vmem %s0, %s230
      %p232 = pneg %p65
      %p233 = pneg %p62
      %s234 = smul.u32 5, %s23
      %p235 = scmp.lt.s32.totalorder %s20, 0
      %s236 = scalar_select %p235, %s20, 0
      %p237 = scmp.lt.s32.totalorder %s234, 4
      %s238 = scalar_select %p237, %s234, 4
      %p239 = scmp.lt.s32.totalorder %s22, 0
      %s240 = scalar_select %p239, %s22, 0
      %s241 = sadd.s32 %s240, %s238
      %s242 = smul.addr %s236, 5
      %s243 = sadd.s32 %s241, %s242
      %s244 = smul.addr %s243, 4
      %s245 = scalar_lea.vmem %s1, %s244
      %p246 = pneg %p95
      %p247 = pneg %p92
      %p248 = scmp.lt.s32.totalorder %s20, 0
      %s249 = scalar_select %p248, %s20, 0
      %p250 = scmp.lt.s32.totalorder %s22, 0
      %s251 = scalar_select %p250, %s22, 0
      %s252 = sadd.s32 %s251, %s249
      %s253 = scalar_lea.vmem %s2, %s252
      %p254 = pneg %p123
      %p255 = pneg %p120
      %p256 = pneg %p153
      %p257 = pneg %p150
      %s258 = sadd.s32 %s20, %s22
      %s259 = smul.u32 32, %s21
      %p260 = scmp.lt.s32.totalorder %s259, 63
      %s261 = scalar_select %p260, %s259, 63
      %p262 = scmp.lt.s32.totalorder %s258, 0
      %s263 = scalar_select %p262, %s258, 0
      %s264 = sadd.s32 %s263, %s261
      %s265 = smul.addr %s264, 8
      %s266 = scalar_lea.vmem %s3, %s265
      %s267 = smul.u32 32, %s21
      %p268 = scmp.lt.s32.totalorder %s20, 0
      %s269 = scalar_select %p268, %s20, 0
      %p270 = scmp.lt.s32.totalorder %s267, 63
      %s271 = scalar_select %p270, %s267, 63
      %p272 = scmp.lt.s32.totalorder %s23, 0
      %s273 = scalar_select %p272, %s23, 0
      %s274 = sadd.s32 %s273, %s271
      %s275 = smul.addr %s269, 64
      %s276 = sadd.s32 %s274, %s275
      %s277 = smul.addr %s276, 4
      %s278 = scalar_lea.vmem %s0, %s277
      %s279 = smul.u32 32, %s21
      %s280 = smul.u32 5, %s23
      %p281 = scmp.lt.s32.totalorder %s20, 0
      %s282 = scalar_select %p281, %s20, 0
      %p283 = scmp.lt.s32.totalorder %s280, 4
      %s284 = scalar_select %p283, %s280, 4
      %p285 = scmp.lt.s32.totalorder %s22, 0
      %s286 = scalar_select %p285, %s22, 0
      %s287 = sadd.s32 %s286, %s284
      %s288 = smul.addr %s282, 5
      %s289 = sadd.s32 %s287, %s288
      %s290 = smul.addr %s289, 4
      %s291 = scalar_lea.vmem %s1, %s290
      %s292 = smul.u32 5, %s23
      %p293 = scmp.lt.s32.totalorder %s20, 0
      %s294 = scalar_select %p293, %s20, 0
      %p295 = scmp.lt.s32.totalorder %s22, 0
      %s296 = scalar_select %p295, %s22, 0
      %s297 = sadd.s32 %s296, %s294
      %s298 = scalar_lea.vmem %s2, %s297
      %s299 = sadd.s32 %s20, %s22
      %s300 = smul.u32 32, %s21
      %p301 = scmp.lt.s32.totalorder %s300, 63
      %s302 = scalar_select %p301, %s300, 63
      %p303 = scmp.lt.s32.totalorder %s299, 0
      %s304 = scalar_select %p303, %s299, 0
      %s305 = sadd.s32 %s304, %s302
      %s306 = smul.addr %s305, 8
      %s307 = scalar_lea.vmem %s3, %s306
      %s308 = sadd.s32 %s20, %s22
      %s309 = smul.u32 32, %s21
      %v311 = vld [vmem:[%s278] sm:$0xf]
      %v312 = vld [vmem:[%s278 + $0x4] sm:$0xf]
      %v313 = vld [vmem:[%s278 + $0x8] sm:$0xf]
      %v314 = vld [vmem:[%s278 + $0xc] sm:$0xf]
      %v315 = vld [vmem:[%s278 + $0x10] sm:$0xf]
      %v316 = vld [vmem:[%s278 + $0x14] sm:$0xf]
      %v317 = vld [vmem:[%s278 + $0x18] sm:$0xf]
      %v318 = vld [vmem:[%s278 + $0x1c] sm:$0xf]
      %v319 = vld [vmem:[%s278 + $0x20] sm:$0xf]
      %v320 = vld [vmem:[%s278 + $0x24] sm:$0xf]
      %v321 = vld [vmem:[%s278 + $0x28] sm:$0xf]
      %v322 = vld [vmem:[%s278 + $0x2c] sm:$0xf]
      %v323 = vld [vmem:[%s278 + $0x30] sm:$0xf]
      %v324 = vld [vmem:[%s278 + $0x34] sm:$0xf]
      %v325 = vld [vmem:[%s278 + $0x38] sm:$0xf]
      %v326 = vld [vmem:[%s278 + $0x3c] sm:$0xf]
      %v327 = vld [vmem:[%s278 + $0x40] sm:$0xf]
      %v328 = vld [vmem:[%s278 + $0x44] sm:$0xf]
      %v329 = vld [vmem:[%s278 + $0x48] sm:$0xf]
      %v330 = vld [vmem:[%s278 + $0x4c] sm:$0xf]
      %v331 = vld [vmem:[%s278 + $0x50] sm:$0xf]
      %v332 = vld [vmem:[%s278 + $0x54] sm:$0xf]
      %v333 = vld [vmem:[%s278 + $0x58] sm:$0xf]
      %v334 = vld [vmem:[%s278 + $0x5c] sm:$0xf]
      %v335 = vld [vmem:[%s278 + $0x60] sm:$0xf]
      %v336 = vld [vmem:[%s278 + $0x64] sm:$0xf]
      %v337 = vld [vmem:[%s278 + $0x68] sm:$0xf]
      %v338 = vld [vmem:[%s278 + $0x6c] sm:$0xf]
      %v339 = vld [vmem:[%s278 + $0x70] sm:$0xf]
      %v340 = vld [vmem:[%s278 + $0x74] sm:$0xf]
      %v341 = vld [vmem:[%s278 + $0x78] sm:$0xf]
      %v342 = vld [vmem:[%s278 + $0x7c] sm:$0xf]
      %v343 = vld [vmem:[%s291] sm:$0xf]
      %v344 = vld [vmem:[%s291 + $0x4] sm:$0xf]
      %v345 = vld [vmem:[%s291 + $0x8] sm:$0xf]
      %v346 = vld [vmem:[%s291 + $0xc] sm:$0xf]
      %v347 = vld [vmem:[%s291 + $0x10] sm:$0x3]
      %v348 = vld [vmem:[%s298] sm:$0x1]
      %v350 = vlaneseq
      %v351 = vshrl.u32 %v350, 7
      %v352 = vsub.s32 0, %v351
      %v353 = vrot.slane %v348, %v352
      %v387 = vunpack.c.l.b16 %v311
      %v388 = vunpack.c.l.b16 %v312
      %v389 = vunpack.c.l.b16 %v313
      %v390 = vunpack.c.l.b16 %v314
      %v391 = vunpack.c.l.b16 %v315
      %v392 = vunpack.c.l.b16 %v316
      %v393 = vunpack.c.l.b16 %v317
      %v394 = vunpack.c.l.b16 %v318
      %v395 = vunpack.c.l.b16 %v319
      %v396 = vunpack.c.l.b16 %v320
      %v397 = vunpack.c.l.b16 %v321
      %v398 = vunpack.c.l.b16 %v322
      %v399 = vunpack.c.l.b16 %v323
      %v400 = vunpack.c.l.b16 %v324
      %v401 = vunpack.c.l.b16 %v325
      %v402 = vunpack.c.l.b16 %v326
      %v403 = vunpack.c.l.b16 %v327
      %v404 = vunpack.c.l.b16 %v328
      %v405 = vunpack.c.l.b16 %v329
      %v406 = vunpack.c.l.b16 %v330
      %v407 = vunpack.c.l.b16 %v331
      %v408 = vunpack.c.l.b16 %v332
      %v409 = vunpack.c.l.b16 %v333
      %v410 = vunpack.c.l.b16 %v334
      %v411 = vunpack.c.l.b16 %v335
      %v412 = vunpack.c.l.b16 %v336
      %v413 = vunpack.c.l.b16 %v337
      %v414 = vunpack.c.l.b16 %v338
      %v415 = vunpack.c.l.b16 %v339
      %v416 = vunpack.c.l.b16 %v340
      %v417 = vunpack.c.l.b16 %v341
      %v418 = vunpack.c.l.b16 %v342
      %v419 = vpack.c.b16 %v388, %v387
      %v420 = vpack.c.b16 %v390, %v389
      %v421 = vpack.c.b16 %v392, %v391
      %v422 = vpack.c.b16 %v394, %v393
      %v423 = vpack.c.b16 %v396, %v395
      %v424 = vpack.c.b16 %v398, %v397
      %v425 = vpack.c.b16 %v400, %v399
      %v426 = vpack.c.b16 %v402, %v401
      %v427 = vpack.c.b16 %v404, %v403
      %v428 = vpack.c.b16 %v406, %v405
      %v429 = vpack.c.b16 %v408, %v407
      %v430 = vpack.c.b16 %v410, %v409
      %v431 = vpack.c.b16 %v412, %v411
      %v432 = vpack.c.b16 %v414, %v413
      %v433 = vpack.c.b16 %v416, %v415
      %v434 = vpack.c.b16 %v418, %v417
      %v440 = vunpack.c.l.b16 %v343
      %v441 = vunpack.c.l.b16 %v344
      %v442 = vunpack.c.l.b16 %v345
      %v443 = vunpack.c.l.b16 %v346
      %v444 = vunpack.c.l.b16 %v347
      %v445 = vpack.c.b16 %v441, %v440
      %v446 = vpack.c.b16 %v443, %v442
      %v447 = vpack.c.b16 %v444, %v444
      %vm450 = vcmask 293888
      %v452 = vsel %vm450, %v419, 0
      %v455 = vsel %vm450, %v420, 0
      %v458 = vsel %vm450, %v421, 0
      %v461 = vsel %vm450, %v422, 0
      %v464 = vsel %vm450, %v423, 0
      %v467 = vsel %vm450, %v424, 0
      %v470 = vsel %vm450, %v425, 0
      %v473 = vsel %vm450, %v426, 0
      %v476 = vsel %vm450, %v427, 0
      %v479 = vsel %vm450, %v428, 0
      %v482 = vsel %vm450, %v429, 0
      %v485 = vsel %vm450, %v430, 0
      %v488 = vsel %vm450, %v431, 0
      %v491 = vsel %vm450, %v432, 0
      %v494 = vsel %vm450, %v433, 0
      %v497 = vsel %vm450, %v434, 0
      %vm499 = vcmask 1041408
      %v501 = vsel %vm499, %v447, 0
      %503 = vmatprep.subr.bf16.mxu0 0
      %504 = vmatpush1.bf16.msra.mxu0 0
      %505 = vmatprep.subr.bf16.mxu0 0
      %506 = vmatpush1.bf16.msra.mxu0 0
      %507 = vmatprep.subr.bf16.mxu0 0
      %508 = vmatpush1.bf16.msra.mxu0 0
      %509 = vmatprep.subr.bf16.mxu0 0
      %510 = vmatpush1.bf16.msra.mxu0 0
      %511 = vmatprep.subr.bf16.mxu0 0
      %512 = vmatpush1.bf16.msra.mxu0 0
      %513 = vmatprep.subr.bf16.mxu0 0
      %514 = vmatpush1.bf16.msra.mxu0 %v501
      %515 = vmatprep.subr.bf16.mxu0 0
      %516 = vmatpush1.bf16.msra.mxu0 %v446
      %517 = vmatprep.subr.bf16.mxu0 0
      %518 = vmatpush1.bf16.msra.mxu0 %v445
      %519 = vmatprep.subr.bf16.mxu0 0
      %520 = vmatpush2.bf16.msra.mxu0 0
      %521 = vmatprep.subr.bf16.mxu0 0
      %522 = vmatpush2.bf16.msra.mxu0 0
      %523 = vmatprep.subr.bf16.mxu0 0
      %524 = vmatpush2.bf16.msra.mxu0 0
      %525 = vmatprep.subr.bf16.mxu0 0
      %526 = vmatpush2.bf16.msra.mxu0 0
      %527 = vmatprep.subr.bf16.mxu0 0
      %528 = vmatpush2.bf16.msra.mxu0 0
      %529 = vmatprep.subr.bf16.mxu0 0
      %530 = vmatpush2.bf16.msra.mxu0 0
      %531 = vmatprep.subr.bf16.mxu0 0
      %532 = vmatpush2.bf16.msra.mxu0 0
      %533 = vmatprep.subr.bf16.mxu0 0
      %534 = vmatpush2.bf16.msra.mxu0 0
      %535 = vmatprep.mubr.bf16.mxu0 0
      %536 = vmatmul.mubr.bf16.gmra.mxu0 %v452
      %v537 = vpop.f32.mrf.mxu0
      %v538 = vadd.f32 %v353, %v537
      %v539 = vpop.f32.mrf.mxu0
      %v540 = vpop.f32.mrf.mxu0
      %v541 = vadd.f32 %v353, %v540
      %v542 = vpop.f32.mrf.mxu0
      %543 = vmatprep.mubr.bf16.mxu0 0
      %544 = vmatmul.mubr.bf16.gmra.mxu0 %v455
      %v545 = vpop.f32.mrf.mxu0
      %v546 = vadd.f32 %v353, %v545
      %v547 = vpop.f32.mrf.mxu0
      %v548 = vpop.f32.mrf.mxu0
      %v549 = vadd.f32 %v353, %v548
      %v550 = vpop.f32.mrf.mxu0
      %551 = vmatprep.mubr.bf16.mxu0 0
      %552 = vmatmul.mubr.bf16.gmra.mxu0 %v458
      %v553 = vpop.f32.mrf.mxu0
      %v554 = vadd.f32 %v353, %v553
      %v555 = vpop.f32.mrf.mxu0
      %v556 = vpop.f32.mrf.mxu0
      %v557 = vadd.f32 %v353, %v556
      %v558 = vpop.f32.mrf.mxu0
      %559 = vmatprep.mubr.bf16.mxu0 0
      %560 = vmatmul.mubr.bf16.gmra.mxu0 %v461
      %v561 = vpop.f32.mrf.mxu0
      %v562 = vadd.f32 %v353, %v561
      %v563 = vpop.f32.mrf.mxu0
      %v564 = vpop.f32.mrf.mxu0
      %v565 = vadd.f32 %v353, %v564
      %v566 = vpop.f32.mrf.mxu0
      %567 = vmatprep.mubr.bf16.mxu0 0
      %568 = vmatmul.mubr.bf16.gmra.mxu0 %v464
      %v569 = vpop.f32.mrf.mxu0
      %v570 = vadd.f32 %v353, %v569
      %v571 = vpop.f32.mrf.mxu0
      %v572 = vpop.f32.mrf.mxu0
      %v573 = vadd.f32 %v353, %v572
      %v574 = vpop.f32.mrf.mxu0
      %575 = vmatprep.mubr.bf16.mxu0 0
      %576 = vmatmul.mubr.bf16.gmra.mxu0 %v467
      %v577 = vpop.f32.mrf.mxu0
      %v578 = vadd.f32 %v353, %v577
      %v579 = vpop.f32.mrf.mxu0
      %v580 = vpop.f32.mrf.mxu0
      %v581 = vadd.f32 %v353, %v580
      %v582 = vpop.f32.mrf.mxu0
      %583 = vmatprep.mubr.bf16.mxu0 0
      %584 = vmatmul.mubr.bf16.gmra.mxu0 %v470
      %v585 = vpop.f32.mrf.mxu0
      %v586 = vadd.f32 %v353, %v585
      %v587 = vpop.f32.mrf.mxu0
      %v588 = vpop.f32.mrf.mxu0
      %v589 = vadd.f32 %v353, %v588
      %v590 = vpop.f32.mrf.mxu0
      %591 = vmatprep.mubr.bf16.mxu0 0
      %592 = vmatmul.mubr.bf16.gmra.mxu0 %v473
      %v593 = vpop.f32.mrf.mxu0
      %v594 = vadd.f32 %v353, %v593
      %v595 = vpop.f32.mrf.mxu0
      %v596 = vpop.f32.mrf.mxu0
      %v597 = vadd.f32 %v353, %v596
      %v598 = vpop.f32.mrf.mxu0
      %599 = vmatprep.mubr.bf16.mxu0 0
      %600 = vmatmul.mubr.bf16.gmra.mxu0 %v476
      %v601 = vpop.f32.mrf.mxu0
      %v602 = vadd.f32 %v353, %v601
      %v603 = vpop.f32.mrf.mxu0
      %v604 = vpop.f32.mrf.mxu0
      %v605 = vadd.f32 %v353, %v604
      %v606 = vpop.f32.mrf.mxu0
      %607 = vmatprep.mubr.bf16.mxu0 0
      %608 = vmatmul.mubr.bf16.gmra.mxu0 %v479
      %v609 = vpop.f32.mrf.mxu0
      %v610 = vadd.f32 %v353, %v609
      %v611 = vpop.f32.mrf.mxu0
      %v612 = vpop.f32.mrf.mxu0
      %v613 = vadd.f32 %v353, %v612
      %v614 = vpop.f32.mrf.mxu0
      %615 = vmatprep.mubr.bf16.mxu0 0
      %616 = vmatmul.mubr.bf16.gmra.mxu0 %v482
      %v617 = vpop.f32.mrf.mxu0
      %v618 = vadd.f32 %v353, %v617
      %v619 = vpop.f32.mrf.mxu0
      %v620 = vpop.f32.mrf.mxu0
      %v621 = vadd.f32 %v353, %v620
      %v622 = vpop.f32.mrf.mxu0
      %623 = vmatprep.mubr.bf16.mxu0 0
      %624 = vmatmul.mubr.bf16.gmra.mxu0 %v485
      %v625 = vpop.f32.mrf.mxu0
      %v626 = vadd.f32 %v353, %v625
      %v627 = vpop.f32.mrf.mxu0
      %v628 = vpop.f32.mrf.mxu0
      %v629 = vadd.f32 %v353, %v628
      %v630 = vpop.f32.mrf.mxu0
      %631 = vmatprep.mubr.bf16.mxu0 0
      %632 = vmatmul.mubr.bf16.gmra.mxu0 %v488
      %v633 = vpop.f32.mrf.mxu0
      %v634 = vadd.f32 %v353, %v633
      %v635 = vpop.f32.mrf.mxu0
      %v636 = vpop.f32.mrf.mxu0
      %v637 = vadd.f32 %v353, %v636
      %v638 = vpop.f32.mrf.mxu0
      %639 = vmatprep.mubr.bf16.mxu0 0
      %640 = vmatmul.mubr.bf16.gmra.mxu0 %v491
      %v641 = vpop.f32.mrf.mxu0
      %v642 = vadd.f32 %v353, %v641
      %v643 = vpop.f32.mrf.mxu0
      %v644 = vpop.f32.mrf.mxu0
      %v645 = vadd.f32 %v353, %v644
      %v646 = vpop.f32.mrf.mxu0
      %647 = vmatprep.mubr.bf16.mxu0 0
      %648 = vmatmul.mubr.bf16.gmra.mxu0 %v494
      %v649 = vpop.f32.mrf.mxu0
      %v650 = vadd.f32 %v353, %v649
      %v651 = vpop.f32.mrf.mxu0
      %v652 = vpop.f32.mrf.mxu0
      %v653 = vadd.f32 %v353, %v652
      %v654 = vpop.f32.mrf.mxu0
      %655 = vmatprep.mubr.bf16.mxu0 0
      %656 = vmatmul.mubr.bf16.gmra.mxu0 %v497
      %v657 = vpop.f32.mrf.mxu0
      %v658 = vadd.f32 %v353, %v657
      %v659 = vpop.f32.mrf.mxu0
      %v660 = vpop.f32.mrf.mxu0
      %v661 = vadd.f32 %v353, %v660
      %v662 = vpop.f32.mrf.mxu0
      %663 = vdwg.mxu0
      %664 = vst [vmem:[%s307] sm:$0xff] %v538
      %665 = vst [vmem:[%s307 + $0x8] sm:$0xff] %v541
      %666 = vst [vmem:[%s307 + $0x10] sm:$0xff] %v546
      %667 = vst [vmem:[%s307 + $0x18] sm:$0xff] %v549
      %668 = vst [vmem:[%s307 + $0x20] sm:$0xff] %v554
      %669 = vst [vmem:[%s307 + $0x28] sm:$0xff] %v557
      %670 = vst [vmem:[%s307 + $0x30] sm:$0xff] %v562
      %671 = vst [vmem:[%s307 + $0x38] sm:$0xff] %v565
      %672 = vst [vmem:[%s307 + $0x40] sm:$0xff] %v570
      %673 = vst [vmem:[%s307 + $0x48] sm:$0xff] %v573
      %674 = vst [vmem:[%s307 + $0x50] sm:$0xff] %v578
      %675 = vst [vmem:[%s307 + $0x58] sm:$0xff] %v581
      %676 = vst [vmem:[%s307 + $0x60] sm:$0xff] %v586
      %677 = vst [vmem:[%s307 + $0x68] sm:$0xff] %v589
      %678 = vst [vmem:[%s307 + $0x70] sm:$0xff] %v594
      %679 = vst [vmem:[%s307 + $0x78] sm:$0xff] %v597
      %680 = vst [vmem:[%s307 + $0x80] sm:$0xff] %v602
      %681 = vst [vmem:[%s307 + $0x88] sm:$0xff] %v605
      %682 = vst [vmem:[%s307 + $0x90] sm:$0xff] %v610
      %683 = vst [vmem:[%s307 + $0x98] sm:$0xff] %v613
      %684 = vst [vmem:[%s307 + $0xa0] sm:$0xff] %v618
      %685 = vst [vmem:[%s307 + $0xa8] sm:$0xff] %v621
      %686 = vst [vmem:[%s307 + $0xb0] sm:$0xff] %v626
      %687 = vst [vmem:[%s307 + $0xb8] sm:$0xff] %v629
      %688 = vst [vmem:[%s307 + $0xc0] sm:$0xff] %v634
      %689 = vst [vmem:[%s307 + $0xc8] sm:$0xff] %v637
      %690 = vst [vmem:[%s307 + $0xd0] sm:$0xff] %v642
      %691 = vst [vmem:[%s307 + $0xd8] sm:$0xff] %v645
      %692 = vst [vmem:[%s307 + $0xe0] sm:$0xff] %v650
      %693 = vst [vmem:[%s307 + $0xe8] sm:$0xff] %v653
      %694 = vst [vmem:[%s307 + $0xf0] sm:$0xff] %v658
      %695 = vst [vmem:[%s307 + $0xf8] sm:$0xff] %v661
      %s696 = sadd.s32 %s20, %s22
      %s697 = smul.u32 32, %s21
      %p698 = scmp.lt.s32.totalorder %s697, 63
      %s699 = scalar_select %p698, %s697, 63
      %p700 = scmp.lt.s32.totalorder %s696, 0
      %s701 = scalar_select %p700, %s696, 0
      %s702 = sadd.s32 %s701, %s699
      %s703 = smul.addr %s702, 8
      %s704 = scalar_lea.vmem %s3, %s703
      // Predicated region
      $region33: #{dcnv2_forward.3} parent=31 // pred_check
        %p705 = pneg %p150
      $region34: #{dcnv2_forward.3} parent=31 // pred_check_branch
        %707 = sbr.rel (%p705) target = $region36
      $region35: #{dcnv2_forward.3} parent=31 // pred_region
        %s708 = sadd.s32 %s20, %s22
        %s709 = smul.u32 32, %s21
      $region36: #{dcnv2_forward.3} parent=31 // pred_fallthru
        _
    $region32: #{dcnv2_forward.3} parent=5 // pred_fallthru
      _
    %p710 = scmp.le.s32.totalorder 2, %s9
    // Predicated region
    $region37: #{dcnv2_forward.3} parent=5 // pred_check
      %p711 = pneg %p710
    $region38: #{dcnv2_forward.3} parent=5 // pred_check_branch
      %713 = sbr.rel (%p711) target = $region40
    $region39: #{dcnv2_forward.3} parent=5 // pred_region
      %s714 = ssub.s32 %s9, 2
      // Predicated region
      $region41: #{dcnv2_forward.3} parent=39 // pred_check
        %p715 = pneg %p156
      $region42: #{dcnv2_forward.3} parent=39 // pred_check_branch
        %717 = sbr.rel (%p715) target = $region44
      $region43: #{dcnv2_forward.3} parent=39 // pred_region
        %s718 = sadd.s32 %s24, %s26
        %s719 = smul.u32 32, %s25
        %p720 = scmp.lt.s32.totalorder %s719, 63
        %s721 = scalar_select %p720, %s719, 63
        %p722 = scmp.lt.s32.totalorder %s718, 0
        %s723 = scalar_select %p722, %s718, 0
        %s724 = sadd.s32 %s723, %s721
        %s725 = smul.addr %s724, 8
        %s726 = scalar_lea.vmem %s3, %s725
      $region44: #{dcnv2_forward.3} parent=39 // pred_fallthru
        _
    $region40: #{dcnv2_forward.3} parent=5 // pred_fallthru
      _
  $region6: #{dcnv2_forward.3} parent=0 // loop_footer
    %s13 = sadd.s32 1, %s9
  $region7: #{dcnv2_forward.3} parent=0 // loop_footer_branch
    %8 = sbr.rel target = $region3
  $region8: #{dcnv2_forward.3} parent=0 // loop_exit
    _

// kernel: dcnv2_forward.4
$region0: #{dcnv2_forward.4}
  #allocation0 [shape = 'u32[]', space=smem, size = 0x4, offset = 0x4, fixed_abs, tag = 'smem constant byte address 0x4 - core index']
  #allocation1 [shape = 'u32[144,128]{1,0:T(1,128)}', space=vmem, size = 0x12000, scoped, tag = 'internal scratch']
  %s0 = inlined_call_operand.vmem [shape: bf16[1,512,36], index: 0, kind: input, shape index: {}]
  %s1 = inlined_call_operand.vmem [shape: bf16[1,36,128], index: 1, kind: input, shape index: {}]
  %s2 = inlined_call_operand.vmem [shape: f32[1,1,128], index: 2, kind: input, shape index: {}]
  %s3 = inlined_call_operand.vmem [shape: bf16[512,128], index: 3, kind: output, shape index: {0}]
  %s4 = inlined_call_operand.vmem [shape: f32[2,8,128], index: 4, kind: output, shape index: {1}]
  %s5 = inlined_call_operand.vmem [shape: f32[2,8,128], index: 5, kind: output, shape index: {2}]
  %6 = xla_tuple %s3, %s4, %s5
  %s7 = sld [smem:[#allocation0]]
  $region61: #{dcnv2_forward.4} parent=0
    _
  %s9 = ssub.s32 1, %s7
  %s10 = scalar_select 0, %s9, %s7
  loop: start=0, step=1, limit=4
  $region2: #{dcnv2_forward.4} parent=0 // loop_pre_header
    _
  $region3: #{dcnv2_forward.4} parent=0 // loop_header
    %s12 = sphi 0, %s16
    %p13 = scmp.ge.s32.totalorder %s12, 4
    %s19 = sphi 0, %s45
    %s20 = sphi 0, %s41
    %s21 = sphi 0, %s37
    %s22 = sphi 0, %s33
    %s23 = sphi 0, %s19
    %s24 = sphi 0, %s20
    %s25 = sphi 0, %s21
    %s26 = sphi 0, %s22
    %s27 = sphi 0, %s23
    %s28 = sphi 0, %s24
    %s29 = sphi 0, %s25
    %s30 = sphi 0, %s26
    %s52 = sphi 0, %s54
    %s55 = sphi 0, %s52
    %s56 = sphi 0, %s55
    %s72 = sphi 0, %s56
    %s82 = sphi 0, %s84
    %s85 = sphi 0, %s82
    %s86 = sphi 0, %s85
    %s102 = sphi 0, %s86
    %s110 = sphi 0, %s112
    %s113 = sphi 0, %s110
    %s114 = sphi 0, %s113
    %s130 = sphi 0, %s114
    %s140 = sphi 0, %s142
    %s143 = sphi 0, %s140
    %s144 = sphi 0, %s143
    %s160 = sphi 0, %s144
    %s170 = sphi 0, %s172
    %s173 = sphi 0, %s170
    %s174 = sphi 0, %s173
    %s190 = sphi 0, %s174
    %s200 = sphi 0, %s202
    %s203 = sphi 0, %s200
    %s204 = sphi 0, %s203
    %s220 = sphi 0, %s204
  $region4: #{dcnv2_forward.4} parent=0 // loop_header_branch
    %15 = sbr.rel (%p13) target = $region8
  $region5: #{dcnv2_forward.4} parent=0 // loop_body
    %s17 = ssub.s32 %s12, 1
    %s18 = ssub.s32 %s12, 2
    %s31 = sadd.s32 1, %s22
    %p32 = scmp.ge.s32.totalorder %s31, 1
    %s33 = scalar_select %p32, 0, %s31
    %s34 = sadd.s32 1, %s21
    %s35 = scalar_select %p32, %s34, %s21
    %p36 = scmp.ge.s32.totalorder %s35, 1
    %s37 = scalar_select %p36, 0, %s35
    %s38 = sadd.s32 1, %s20
    %s39 = scalar_select %p36, %s38, %s20
    %p40 = scmp.ge.s32.totalorder %s39, 2
    %s41 = scalar_select %p40, 0, %s39
    %s42 = sadd.s32 1, %s19
    %s43 = scalar_select %p40, %s42, %s19
    %p44 = scmp.ge.s32.totalorder %s43, 1
    %s45 = scalar_select %p44, 0, %s43
    %s46 = ssub.s32 %s19, %s45
    %s47 = ssub.s32 %s20, %s41
    %s48 = sor.u32 %s46, %s47
    %s49 = ssub.s32 %s22, %s33
    %s50 = sor.u32 %s48, %s49
    %p51 = scmp.eq.s32.totalorder %s50, 0
    %s53 = sadd.s32 %s52, 1
    %s54 = scalar_select %p51, %s52, %s53
    %p57 = pneg %p51
    %p58 = scmp.eq.s32.totalorder %s12, 1
    %p59 = por %p57, %p58
    %p60 = scmp.ne.s32.totalorder %s52, %s55
    %p61 = scmp.eq.s32.totalorder %s12, 0
    %p62 = por %p60, %p61
    %p63 = scmp.ne.s32.totalorder %s52, %s55
    %p64 = scmp.eq.s32.totalorder %s17, 1
    %p65 = por %p63, %p64
    %p66 = scmp.ne.s32.totalorder %s55, %s56
    %p67 = scmp.eq.s32.totalorder %s17, 0
    %p68 = por %p66, %p67
    %p69 = scmp.ne.s32.totalorder %s55, %s56
    %p70 = scmp.eq.s32.totalorder %s18, 1
    %p71 = por %p69, %p70
    %p73 = scmp.ne.s32.totalorder %s56, %s72
    %p74 = scmp.eq.s32.totalorder %s18, 0
    %p75 = por %p73, %p74
    %s76 = ssub.s32 %s19, %s45
    %s77 = ssub.s32 %s22, %s33
    %s78 = sor.u32 %s76, %s77
    %s79 = ssub.s32 %s21, %s37
    %s80 = sor.u32 %s78, %s79
    %p81 = scmp.eq.s32.totalorder %s80, 0
    %s83 = sadd.s32 %s82, 1
    %s84 = scalar_select %p81, %s82, %s83
    %p87 = pneg %p81
    %p88 = scmp.eq.s32.totalorder %s12, 1
    %p89 = por %p87, %p88
    %p90 = scmp.ne.s32.totalorder %s82, %s85
    %p91 = scmp.eq.s32.totalorder %s12, 0
    %p92 = por %p90, %p91
    %p93 = scmp.ne.s32.totalorder %s82, %s85
    %p94 = scmp.eq.s32.totalorder %s17, 1
    %p95 = por %p93, %p94
    %p96 = scmp.ne.s32.totalorder %s85, %s86
    %p97 = scmp.eq.s32.totalorder %s17, 0
    %p98 = por %p96, %p97
    %p99 = scmp.ne.s32.totalorder %s85, %s86
    %p100 = scmp.eq.s32.totalorder %s18, 1
    %p101 = por %p99, %p100
    %p103 = scmp.ne.s32.totalorder %s86, %s102
    %p104 = scmp.eq.s32.totalorder %s18, 0
    %p105 = por %p103, %p104
    %s106 = ssub.s32 %s19, %s45
    %s107 = ssub.s32 %s21, %s37
    %s108 = sor.u32 %s106, %s107
    %p109 = scmp.eq.s32.totalorder %s108, 0
    %s111 = sadd.s32 %s110, 1
    %s112 = scalar_select %p109, %s110, %s111
    %p115 = pneg %p109
    %p116 = scmp.eq.s32.totalorder %s12, 1
    %p117 = por %p115, %p116
    %p118 = scmp.ne.s32.totalorder %s110, %s113
    %p119 = scmp.eq.s32.totalorder %s12, 0
    %p120 = por %p118, %p119
    %p121 = scmp.ne.s32.totalorder %s110, %s113
    %p122 = scmp.eq.s32.totalorder %s17, 1
    %p123 = por %p121, %p122
    %p124 = scmp.ne.s32.totalorder %s113, %s114
    %p125 = scmp.eq.s32.totalorder %s17, 0
    %p126 = por %p124, %p125
    %p127 = scmp.ne.s32.totalorder %s113, %s114
    %p128 = scmp.eq.s32.totalorder %s18, 1
    %p129 = por %p127, %p128
    %p131 = scmp.ne.s32.totalorder %s114, %s130
    %p132 = scmp.eq.s32.totalorder %s18, 0
    %p133 = por %p131, %p132
    %s134 = sadd.s32 %s19, %s21
    %s135 = sadd.s32 %s45, %s37
    %s136 = ssub.s32 %s20, %s41
    %s137 = ssub.s32 %s134, %s135
    %s138 = sor.u32 %s136, %s137
    %p139 = scmp.eq.s32.totalorder %s138, 0
    %s141 = sadd.s32 %s140, 1
    %s142 = scalar_select %p139, %s140, %s141
    %p145 = pneg %p139
    %p146 = scmp.eq.s32.totalorder %s12, 1
    %p147 = por %p145, %p146
    %p148 = scmp.ne.s32.totalorder %s140, %s143
    %p149 = scmp.eq.s32.totalorder %s12, 0
    %p150 = por %p148, %p149
    %p151 = scmp.ne.s32.totalorder %s140, %s143
    %p152 = scmp.eq.s32.totalorder %s17, 1
    %p153 = por %p151, %p152
    %p154 = scmp.ne.s32.totalorder %s143, %s144
    %p155 = scmp.eq.s32.totalorder %s17, 0
    %p156 = por %p154, %p155
    %p157 = scmp.ne.s32.totalorder %s143, %s144
    %p158 = scmp.eq.s32.totalorder %s18, 1
    %p159 = por %p157, %p158
    %p161 = scmp.ne.s32.totalorder %s144, %s160
    %p162 = scmp.eq.s32.totalorder %s18, 0
    %p163 = por %p161, %p162
    %s164 = sadd.s32 %s19, %s21
    %s165 = sadd.s32 %s45, %s37
    %s166 = ssub.s32 %s20, %s41
    %s167 = ssub.s32 %s164, %s165
    %s168 = sor.u32 %s166, %s167
    %p169 = scmp.eq.s32.totalorder %s168, 0
    %s171 = sadd.s32 %s170, 1
    %s172 = scalar_select %p169, %s170, %s171
    %p175 = pneg %p169
    %p176 = scmp.eq.s32.totalorder %s12, 1
    %p177 = por %p175, %p176
    %p178 = scmp.ne.s32.totalorder %s170, %s173
    %p179 = scmp.eq.s32.totalorder %s12, 0
    %p180 = por %p178, %p179
    %p181 = scmp.ne.s32.totalorder %s170, %s173
    %p182 = scmp.eq.s32.totalorder %s17, 1
    %p183 = por %p181, %p182
    %p184 = scmp.ne.s32.totalorder %s173, %s174
    %p185 = scmp.eq.s32.totalorder %s17, 0
    %p186 = por %p184, %p185
    %p187 = scmp.ne.s32.totalorder %s173, %s174
    %p188 = scmp.eq.s32.totalorder %s18, 1
    %p189 = por %p187, %p188
    %p191 = scmp.ne.s32.totalorder %s174, %s190
    %p192 = scmp.eq.s32.totalorder %s18, 0
    %p193 = por %p191, %p192
    %s194 = sadd.s32 %s19, %s21
    %s195 = sadd.s32 %s45, %s37
    %s196 = ssub.s32 %s20, %s41
    %s197 = ssub.s32 %s194, %s195
    %s198 = sor.u32 %s196, %s197
    %p199 = scmp.eq.s32.totalorder %s198, 0
    %s201 = sadd.s32 %s200, 1
    %s202 = scalar_select %p199, %s200, %s201
    %p205 = pneg %p199
    %p206 = scmp.eq.s32.totalorder %s12, 1
    %p207 = por %p205, %p206
    %p208 = scmp.ne.s32.totalorder %s200, %s203
    %p209 = scmp.eq.s32.totalorder %s12, 0
    %p210 = por %p208, %p209
    %p211 = scmp.ne.s32.totalorder %s200, %s203
    %p212 = scmp.eq.s32.totalorder %s17, 1
    %p213 = por %p211, %p212
    %p214 = scmp.ne.s32.totalorder %s203, %s204
    %p215 = scmp.eq.s32.totalorder %s17, 0
    %p216 = por %p214, %p215
    %p217 = scmp.ne.s32.totalorder %s203, %s204
    %p218 = scmp.eq.s32.totalorder %s18, 1
    %p219 = por %p217, %p218
    %p221 = scmp.ne.s32.totalorder %s204, %s220
    %p222 = scmp.eq.s32.totalorder %s18, 0
    %p223 = por %p221, %p222
    %p224 = scmp.le.s32.totalorder 1, %s12
    %p225 = scmp.lt.s32.totalorder %s12, 3
    %p226 = pnand %p224, %p225
    %p227 = pneg %p226
    // Predicated region
    $region9: #{dcnv2_forward.4} parent=5 // pred_check
      _
    $region10: #{dcnv2_forward.4} parent=5 // pred_check_branch
      %229 = sbr.rel (%p226) target = $region12
    $region11: #{dcnv2_forward.4} parent=5 // pred_region
      %s230 = ssub.s32 %s12, 1
      // Predicated region
      $region13: #{dcnv2_forward.4} parent=11 // pred_check
        %p231 = pneg %p98
      $region14: #{dcnv2_forward.4} parent=11 // pred_check_branch
        %233 = sbr.rel (%p231) target = $region16
      $region15: #{dcnv2_forward.4} parent=11 // pred_region
        %s234 = smul.u32 5, %s26
        %p235 = scmp.lt.s32.totalorder %s23, 0
        %s236 = scalar_select %p235, %s23, 0
        %p237 = scmp.lt.s32.totalorder %s234, 4
        %s238 = scalar_select %p237, %s234, 4
        %p239 = scmp.lt.s32.totalorder %s25, 0
        %s240 = scalar_select %p239, %s25, 0
        %s241 = sadd.s32 %s240, %s238
        %s242 = smul.addr %s236, 5
        %s243 = sadd.s32 %s241, %s242
        %s244 = smul.addr %s243, 4
        %s245 = scalar_lea.vmem %s1, %s244
        %s246 = smul.u32 5, %s26
      $region16: #{dcnv2_forward.4} parent=11 // pred_fallthru
        _
      // Predicated region
      $region17: #{dcnv2_forward.4} parent=11 // pred_check
        %p247 = pneg %p126
      $region18: #{dcnv2_forward.4} parent=11 // pred_check_branch
        %249 = sbr.rel (%p247) target = $region20
      $region19: #{dcnv2_forward.4} parent=11 // pred_region
        %p250 = scmp.lt.s32.totalorder %s23, 0
        %s251 = scalar_select %p250, %s23, 0
        %p252 = scmp.lt.s32.totalorder %s25, 0
        %s253 = scalar_select %p252, %s25, 0
        %s254 = sadd.s32 %s253, %s251
        %s255 = scalar_lea.vmem %s2, %s254
      $region20: #{dcnv2_forward.4} parent=11 // pred_fallthru
        _
    $region12: #{dcnv2_forward.4} parent=5 // pred_fallthru
      _
    %p256 = scmp.lt.s32.totalorder %s12, 2
    // Predicated region
    $region21: #{dcnv2_forward.4} parent=5 // pred_check
      %p257 = pneg %p256
    $region22: #{dcnv2_forward.4} parent=5 // pred_check_branch
      %259 = sbr.rel (%p257) target = $region24
    $region23: #{dcnv2_forward.4} parent=5 // pred_region
      // Predicated region
      $region25: #{dcnv2_forward.4} parent=23 // pred_check
        %p260 = pneg %p62
      $region26: #{dcnv2_forward.4} parent=23 // pred_check_branch
        %262 = sbr.rel (%p260) target = $region28
      $region27: #{dcnv2_forward.4} parent=23 // pred_region
        %s263 = smul.u32 32, %s20
        %p264 = scmp.lt.s32.totalorder %s19, 0
        %s265 = scalar_select %p264, %s19, 0
        %p266 = scmp.lt.s32.totalorder %s263, 63
        %s267 = scalar_select %p266, %s263, 63
        %p268 = scmp.lt.s32.totalorder %s22, 0
        %s269 = scalar_select %p268, %s22, 0
        %s270 = sadd.s32 %s269, %s267
        %s271 = smul.addr %s265, 64
        %s272 = sadd.s32 %s270, %s271
        %s273 = smul.addr %s272, 4
        %s274 = scalar_lea.vmem %s0, %s273
        %s275 = smul.u32 32, %s20
      $region28: #{dcnv2_forward.4} parent=23 // pred_fallthru
        _
    $region24: #{dcnv2_forward.4} parent=5 // pred_fallthru
      _
    %p276 = scmp.le.s32.totalorder 1, %s12
    %p277 = scmp.lt.s32.totalorder %s12, 3
    %p278 = pnand %p276, %p277
    %p279 = pneg %p278
    // Predicated region
    $region29: #{dcnv2_forward.4} parent=5 // pred_check
      _
    $region30: #{dcnv2_forward.4} parent=5 // pred_check_branch
      %281 = sbr.rel (%p278) target = $region32
    $region31: #{dcnv2_forward.4} parent=5 // pred_region
      %s282 = ssub.s32 %s12, 1
      %s283 = smul.u32 32, %s24
      %p284 = scmp.lt.s32.totalorder %s23, 0
      %s285 = scalar_select %p284, %s23, 0
      %p286 = scmp.lt.s32.totalorder %s283, 63
      %s287 = scalar_select %p286, %s283, 63
      %p288 = scmp.lt.s32.totalorder %s26, 0
      %s289 = scalar_select %p288, %s26, 0
      %s290 = sadd.s32 %s289, %s287
      %s291 = smul.addr %s285, 64
      %s292 = sadd.s32 %s290, %s291
      %s293 = smul.addr %s292, 4
      %s294 = scalar_lea.vmem %s0, %s293
      %p295 = pneg %p68
      %p296 = pneg %p65
      %s297 = smul.u32 5, %s26
      %p298 = scmp.lt.s32.totalorder %s23, 0
      %s299 = scalar_select %p298, %s23, 0
      %p300 = scmp.lt.s32.totalorder %s297, 4
      %s301 = scalar_select %p300, %s297, 4
      %p302 = scmp.lt.s32.totalorder %s25, 0
      %s303 = scalar_select %p302, %s25, 0
      %s304 = sadd.s32 %s303, %s301
      %s305 = smul.addr %s299, 5
      %s306 = sadd.s32 %s304, %s305
      %s307 = smul.addr %s306, 4
      %s308 = scalar_lea.vmem %s1, %s307
      %p309 = pneg %p98
      %p310 = pneg %p95
      %p311 = scmp.lt.s32.totalorder %s23, 0
      %s312 = scalar_select %p311, %s23, 0
      %p313 = scmp.lt.s32.totalorder %s25, 0
      %s314 = scalar_select %p313, %s25, 0
      %s315 = sadd.s32 %s314, %s312
      %s316 = scalar_lea.vmem %s2, %s315
      %p317 = pneg %p126
      %p318 = pneg %p123
      %p319 = pneg %p156
      %p320 = pneg %p153
      %s321 = sadd.s32 %s23, %s25
      %s322 = smul.u32 32, %s24
      %p323 = scmp.lt.s32.totalorder %s322, 63
      %s324 = scalar_select %p323, %s322, 63
      %p325 = scmp.lt.s32.totalorder %s321, 0
      %s326 = scalar_select %p325, %s321, 0
      %s327 = sadd.s32 %s326, %s324
      %s328 = smul.addr %s327, 4
      %s329 = scalar_lea.vmem %s3, %s328
      %p330 = pneg %p186
      %p331 = pneg %p183
      %s332 = sadd.s32 %s23, %s25
      %p333 = scmp.lt.s32.totalorder %s24, 1
      %s334 = scalar_select %p333, %s24, 1
      %p335 = scmp.lt.s32.totalorder %s332, 0
      %s336 = scalar_select %p335, %s332, 0
      %s337 = sadd.s32 %s336, %s334
      %s338 = smul.addr %s337, 8
      %s339 = scalar_lea.vmem %s4, %s338
      %p340 = pneg %p216
      %p341 = pneg %p213
      %s342 = sadd.s32 %s23, %s25
      %p343 = scmp.lt.s32.totalorder %s24, 1
      %s344 = scalar_select %p343, %s24, 1
      %p345 = scmp.lt.s32.totalorder %s342, 0
      %s346 = scalar_select %p345, %s342, 0
      %s347 = sadd.s32 %s346, %s344
      %s348 = smul.addr %s347, 8
      %s349 = scalar_lea.vmem %s5, %s348
      %s350 = smul.u32 32, %s24
      %p351 = scmp.lt.s32.totalorder %s23, 0
      %s352 = scalar_select %p351, %s23, 0
      %p353 = scmp.lt.s32.totalorder %s350, 63
      %s354 = scalar_select %p353, %s350, 63
      %p355 = scmp.lt.s32.totalorder %s26, 0
      %s356 = scalar_select %p355, %s26, 0
      %s357 = sadd.s32 %s356, %s354
      %s358 = smul.addr %s352, 64
      %s359 = sadd.s32 %s357, %s358
      %s360 = smul.addr %s359, 4
      %s361 = scalar_lea.vmem %s0, %s360
      %s362 = smul.u32 32, %s24
      %s363 = smul.u32 5, %s26
      %p364 = scmp.lt.s32.totalorder %s23, 0
      %s365 = scalar_select %p364, %s23, 0
      %p366 = scmp.lt.s32.totalorder %s363, 4
      %s367 = scalar_select %p366, %s363, 4
      %p368 = scmp.lt.s32.totalorder %s25, 0
      %s369 = scalar_select %p368, %s25, 0
      %s370 = sadd.s32 %s369, %s367
      %s371 = smul.addr %s365, 5
      %s372 = sadd.s32 %s370, %s371
      %s373 = smul.addr %s372, 4
      %s374 = scalar_lea.vmem %s1, %s373
      %s375 = smul.u32 5, %s26
      %p376 = scmp.lt.s32.totalorder %s23, 0
      %s377 = scalar_select %p376, %s23, 0
      %p378 = scmp.lt.s32.totalorder %s25, 0
      %s379 = scalar_select %p378, %s25, 0
      %s380 = sadd.s32 %s379, %s377
      %s381 = scalar_lea.vmem %s2, %s380
      %s382 = sadd.s32 %s23, %s25
      %s383 = smul.u32 32, %s24
      %p384 = scmp.lt.s32.totalorder %s383, 63
      %s385 = scalar_select %p384, %s383, 63
      %p386 = scmp.lt.s32.totalorder %s382, 0
      %s387 = scalar_select %p386, %s382, 0
      %s388 = sadd.s32 %s387, %s385
      %s389 = smul.addr %s388, 4
      %s390 = scalar_lea.vmem %s3, %s389
      %s391 = sadd.s32 %s23, %s25
      %s392 = smul.u32 32, %s24
      %s393 = sadd.s32 %s23, %s25
      %p394 = scmp.lt.s32.totalorder %s24, 1
      %s395 = scalar_select %p394, %s24, 1
      %p396 = scmp.lt.s32.totalorder %s393, 0
      %s397 = scalar_select %p396, %s393, 0
      %s398 = sadd.s32 %s397, %s395
      %s399 = smul.addr %s398, 8
      %s400 = scalar_lea.vmem %s4, %s399
      %s401 = sadd.s32 %s23, %s25
      %s402 = sadd.s32 %s23, %s25
      %p403 = scmp.lt.s32.totalorder %s24, 1
      %s404 = scalar_select %p403, %s24, 1
      %p405 = scmp.lt.s32.totalorder %s402, 0
      %s406 = scalar_select %p405, %s402, 0
      %s407 = sadd.s32 %s406, %s404
      %s408 = smul.addr %s407, 8
      %s409 = scalar_lea.vmem %s5, %s408
      %s410 = sadd.s32 %s23, %s25
      %v412 = vld [vmem:[%s361] sm:$0xf]
      %v413 = vld [vmem:[%s361 + $0x4] sm:$0xf]
      %v414 = vld [vmem:[%s361 + $0x8] sm:$0xf]
      %v415 = vld [vmem:[%s361 + $0xc] sm:$0xf]
      %v416 = vld [vmem:[%s361 + $0x10] sm:$0xf]
      %v417 = vld [vmem:[%s361 + $0x14] sm:$0xf]
      %v418 = vld [vmem:[%s361 + $0x18] sm:$0xf]
      %v419 = vld [vmem:[%s361 + $0x1c] sm:$0xf]
      %v420 = vld [vmem:[%s361 + $0x20] sm:$0xf]
      %v421 = vld [vmem:[%s361 + $0x24] sm:$0xf]
      %v422 = vld [vmem:[%s361 + $0x28] sm:$0xf]
      %v423 = vld [vmem:[%s361 + $0x2c] sm:$0xf]
      %v424 = vld [vmem:[%s361 + $0x30] sm:$0xf]
      %v425 = vld [vmem:[%s361 + $0x34] sm:$0xf]
      %v426 = vld [vmem:[%s361 + $0x38] sm:$0xf]
      %v427 = vld [vmem:[%s361 + $0x3c] sm:$0xf]
      %v428 = vld [vmem:[%s361 + $0x40] sm:$0xf]
      %v429 = vld [vmem:[%s361 + $0x44] sm:$0xf]
      %v430 = vld [vmem:[%s361 + $0x48] sm:$0xf]
      %v431 = vld [vmem:[%s361 + $0x4c] sm:$0xf]
      %v432 = vld [vmem:[%s361 + $0x50] sm:$0xf]
      %v433 = vld [vmem:[%s361 + $0x54] sm:$0xf]
      %v434 = vld [vmem:[%s361 + $0x58] sm:$0xf]
      %v435 = vld [vmem:[%s361 + $0x5c] sm:$0xf]
      %v436 = vld [vmem:[%s361 + $0x60] sm:$0xf]
      %v437 = vld [vmem:[%s361 + $0x64] sm:$0xf]
      %v438 = vld [vmem:[%s361 + $0x68] sm:$0xf]
      %v439 = vld [vmem:[%s361 + $0x6c] sm:$0xf]
      %v440 = vld [vmem:[%s361 + $0x70] sm:$0xf]
      %v441 = vld [vmem:[%s361 + $0x74] sm:$0xf]
      %v442 = vld [vmem:[%s361 + $0x78] sm:$0xf]
      %v443 = vld [vmem:[%s361 + $0x7c] sm:$0xf]
      %v444 = vld [vmem:[%s374] sm:$0xf]
      %v445 = vld [vmem:[%s374 + $0x4] sm:$0xf]
      %v446 = vld [vmem:[%s374 + $0x8] sm:$0xf]
      %v447 = vld [vmem:[%s374 + $0xc] sm:$0xf]
      %v448 = vld [vmem:[%s374 + $0x10] sm:$0x3]
      %v449 = vld [vmem:[%s381] sm:$0x1]
      %v451 = vlaneseq
      %v452 = vshrl.u32 %v451, 7
      %v453 = vsub.s32 0, %v452
      %v454 = vrot.slane %v449, %v453
      %v488 = vunpack.c.l.b16 %v412
      %v489 = vunpack.c.l.b16 %v413
      %v490 = vunpack.c.l.b16 %v414
      %v491 = vunpack.c.l.b16 %v415
      %v492 = vunpack.c.l.b16 %v416
      %v493 = vunpack.c.l.b16 %v417
      %v494 = vunpack.c.l.b16 %v418
      %v495 = vunpack.c.l.b16 %v419
      %v496 = vunpack.c.l.b16 %v420
      %v497 = vunpack.c.l.b16 %v421
      %v498 = vunpack.c.l.b16 %v422
      %v499 = vunpack.c.l.b16 %v423
      %v500 = vunpack.c.l.b16 %v424
      %v501 = vunpack.c.l.b16 %v425
      %v502 = vunpack.c.l.b16 %v426
      %v503 = vunpack.c.l.b16 %v427
      %v504 = vunpack.c.l.b16 %v428
      %v505 = vunpack.c.l.b16 %v429
      %v506 = vunpack.c.l.b16 %v430
      %v507 = vunpack.c.l.b16 %v431
      %v508 = vunpack.c.l.b16 %v432
      %v509 = vunpack.c.l.b16 %v433
      %v510 = vunpack.c.l.b16 %v434
      %v511 = vunpack.c.l.b16 %v435
      %v512 = vunpack.c.l.b16 %v436
      %v513 = vunpack.c.l.b16 %v437
      %v514 = vunpack.c.l.b16 %v438
      %v515 = vunpack.c.l.b16 %v439
      %v516 = vunpack.c.l.b16 %v440
      %v517 = vunpack.c.l.b16 %v441
      %v518 = vunpack.c.l.b16 %v442
      %v519 = vunpack.c.l.b16 %v443
      %v520 = vpack.c.b16 %v489, %v488
      %v521 = vpack.c.b16 %v491, %v490
      %v522 = vpack.c.b16 %v493, %v492
      %v523 = vpack.c.b16 %v495, %v494
      %v524 = vpack.c.b16 %v497, %v496
      %v525 = vpack.c.b16 %v499, %v498
      %v526 = vpack.c.b16 %v501, %v500
      %v527 = vpack.c.b16 %v503, %v502
      %v528 = vpack.c.b16 %v505, %v504
      %v529 = vpack.c.b16 %v507, %v506
      %v530 = vpack.c.b16 %v509, %v508
      %v531 = vpack.c.b16 %v511, %v510
      %v532 = vpack.c.b16 %v513, %v512
      %v533 = vpack.c.b16 %v515, %v514
      %v534 = vpack.c.b16 %v517, %v516
      %v535 = vpack.c.b16 %v519, %v518
      %v541 = vunpack.c.l.b16 %v444
      %v542 = vunpack.c.l.b16 %v445
      %v543 = vunpack.c.l.b16 %v446
      %v544 = vunpack.c.l.b16 %v447
      %v545 = vunpack.c.l.b16 %v448
      %v546 = vpack.c.b16 %v542, %v541
      %v547 = vpack.c.b16 %v544, %v543
      %v548 = vpack.c.b16 %v545, %v545
      %vm551 = vcmask 293888
      %v553 = vsel %vm551, %v520, 0
      %v556 = vsel %vm551, %v521, 0
      %v559 = vsel %vm551, %v522, 0
      %v562 = vsel %vm551, %v523, 0
      %v565 = vsel %vm551, %v524, 0
      %v568 = vsel %vm551, %v525, 0
      %v571 = vsel %vm551, %v526, 0
      %v574 = vsel %vm551, %v527, 0
      %v577 = vsel %vm551, %v528, 0
      %v580 = vsel %vm551, %v529, 0
      %v583 = vsel %vm551, %v530, 0
      %v586 = vsel %vm551, %v531, 0
      %v589 = vsel %vm551, %v532, 0
      %v592 = vsel %vm551, %v533, 0
      %v595 = vsel %vm551, %v534, 0
      %v598 = vsel %vm551, %v535, 0
      %vm600 = vcmask 1041408
      %v602 = vsel %vm600, %v548, 0
      %604 = vmatprep.subr.bf16.mxu0 0
      %605 = vmatpush1.bf16.msra.mxu0 0
      %606 = vmatprep.subr.bf16.mxu0 0
      %607 = vmatpush1.bf16.msra.mxu0 0
      %608 = vmatprep.subr.bf16.mxu0 0
      %609 = vmatpush1.bf16.msra.mxu0 0
      %610 = vmatprep.subr.bf16.mxu0 0
      %611 = vmatpush1.bf16.msra.mxu0 0
      %612 = vmatprep.subr.bf16.mxu0 0
      %613 = vmatpush1.bf16.msra.mxu0 0
      %614 = vmatprep.subr.bf16.mxu0 0
      %615 = vmatpush1.bf16.msra.mxu0 %v602
      %616 = vmatprep.subr.bf16.mxu0 0
      %617 = vmatpush1.bf16.msra.mxu0 %v547
      %618 = vmatprep.subr.bf16.mxu0 0
      %619 = vmatpush1.bf16.msra.mxu0 %v546
      %620 = vmatprep.subr.bf16.mxu0 0
      %621 = vmatpush2.bf16.msra.mxu0 0
      %622 = vmatprep.subr.bf16.mxu0 0
      %623 = vmatpush2.bf16.msra.mxu0 0
      %624 = vmatprep.subr.bf16.mxu0 0
      %625 = vmatpush2.bf16.msra.mxu0 0
      %626 = vmatprep.subr.bf16.mxu0 0
      %627 = vmatpush2.bf16.msra.mxu0 0
      %628 = vmatprep.subr.bf16.mxu0 0
      %629 = vmatpush2.bf16.msra.mxu0 0
      %630 = vmatprep.subr.bf16.mxu0 0
      %631 = vmatpush2.bf16.msra.mxu0 0
      %632 = vmatprep.subr.bf16.mxu0 0
      %633 = vmatpush2.bf16.msra.mxu0 0
      %634 = vmatprep.subr.bf16.mxu0 0
      %635 = vmatpush2.bf16.msra.mxu0 0
      %636 = vmatprep.mubr.bf16.mxu0 0
      %637 = vmatmul.mubr.bf16.gmra.mxu0 %v553
      %v638 = vpop.f32.mrf.mxu0
      %v639 = vadd.f32 %v454, %v638
      %v640 = vpop.f32.mrf.mxu0
      %v641 = vpop.f32.mrf.mxu0
      %v642 = vadd.f32 %v454, %v641
      %v643 = vpop.f32.mrf.mxu0
      %644 = vmatprep.mubr.bf16.mxu0 0
      %645 = vmatmul.mubr.bf16.gmra.mxu0 %v556
      %v646 = vpop.f32.mrf.mxu0
      %v647 = vadd.f32 %v454, %v646
      %v648 = vpop.f32.mrf.mxu0
      %v649 = vpop.f32.mrf.mxu0
      %v650 = vadd.f32 %v454, %v649
      %v651 = vpop.f32.mrf.mxu0
      %652 = vmatprep.mubr.bf16.mxu0 0
      %653 = vmatmul.mubr.bf16.gmra.mxu0 %v559
      %v654 = vpop.f32.mrf.mxu0
      %v655 = vadd.f32 %v454, %v654
      %v656 = vpop.f32.mrf.mxu0
      %v657 = vpop.f32.mrf.mxu0
      %v658 = vadd.f32 %v454, %v657
      %v659 = vpop.f32.mrf.mxu0
      %660 = vmatprep.mubr.bf16.mxu0 0
      %661 = vmatmul.mubr.bf16.gmra.mxu0 %v562
      %v662 = vpop.f32.mrf.mxu0
      %v663 = vadd.f32 %v454, %v662
      %v664 = vpop.f32.mrf.mxu0
      %v665 = vpop.f32.mrf.mxu0
      %v666 = vadd.f32 %v454, %v665
      %v667 = vpop.f32.mrf.mxu0
      %668 = vmatprep.mubr.bf16.mxu0 0
      %669 = vmatmul.mubr.bf16.gmra.mxu0 %v565
      %v670 = vpop.f32.mrf.mxu0
      %v671 = vadd.f32 %v454, %v670
      %v672 = vpop.f32.mrf.mxu0
      %v673 = vpop.f32.mrf.mxu0
      %v674 = vadd.f32 %v454, %v673
      %v675 = vpop.f32.mrf.mxu0
      %676 = vmatprep.mubr.bf16.mxu0 0
      %677 = vmatmul.mubr.bf16.gmra.mxu0 %v568
      %v678 = vpop.f32.mrf.mxu0
      %v679 = vadd.f32 %v454, %v678
      %v680 = vpop.f32.mrf.mxu0
      %v681 = vpop.f32.mrf.mxu0
      %v682 = vadd.f32 %v454, %v681
      %v683 = vpop.f32.mrf.mxu0
      %684 = vmatprep.mubr.bf16.mxu0 0
      %685 = vmatmul.mubr.bf16.gmra.mxu0 %v571
      %v686 = vpop.f32.mrf.mxu0
      %v687 = vadd.f32 %v454, %v686
      %v688 = vpop.f32.mrf.mxu0
      %v689 = vpop.f32.mrf.mxu0
      %v690 = vadd.f32 %v454, %v689
      %v691 = vpop.f32.mrf.mxu0
      %692 = vmatprep.mubr.bf16.mxu0 0
      %693 = vmatmul.mubr.bf16.gmra.mxu0 %v574
      %v694 = vpop.f32.mrf.mxu0
      %v695 = vadd.f32 %v454, %v694
      %v696 = vpop.f32.mrf.mxu0
      %v697 = vpop.f32.mrf.mxu0
      %v698 = vadd.f32 %v454, %v697
      %v699 = vpop.f32.mrf.mxu0
      %700 = vmatprep.mubr.bf16.mxu0 0
      %701 = vmatmul.mubr.bf16.gmra.mxu0 %v577
      %v702 = vpop.f32.mrf.mxu0
      %v703 = vadd.f32 %v454, %v702
      %v704 = vpop.f32.mrf.mxu0
      %v705 = vpop.f32.mrf.mxu0
      %v706 = vadd.f32 %v454, %v705
      %v707 = vpop.f32.mrf.mxu0
      %708 = vmatprep.mubr.bf16.mxu0 0
      %709 = vmatmul.mubr.bf16.gmra.mxu0 %v580
      %v710 = vpop.f32.mrf.mxu0
      %v711 = vadd.f32 %v454, %v710
      %v712 = vpop.f32.mrf.mxu0
      %v713 = vpop.f32.mrf.mxu0
      %v714 = vadd.f32 %v454, %v713
      %v715 = vpop.f32.mrf.mxu0
      %716 = vmatprep.mubr.bf16.mxu0 0
      %717 = vmatmul.mubr.bf16.gmra.mxu0 %v583
      %v718 = vpop.f32.mrf.mxu0
      %v719 = vadd.f32 %v454, %v718
      %v720 = vpop.f32.mrf.mxu0
      %v721 = vpop.f32.mrf.mxu0
      %v722 = vadd.f32 %v454, %v721
      %v723 = vpop.f32.mrf.mxu0
      %724 = vmatprep.mubr.bf16.mxu0 0
      %725 = vmatmul.mubr.bf16.gmra.mxu0 %v586
      %v726 = vpop.f32.mrf.mxu0
      %v727 = vadd.f32 %v454, %v726
      %v728 = vpop.f32.mrf.mxu0
      %v729 = vpop.f32.mrf.mxu0
      %v730 = vadd.f32 %v454, %v729
      %v731 = vpop.f32.mrf.mxu0
      %732 = vmatprep.mubr.bf16.mxu0 0
      %733 = vmatmul.mubr.bf16.gmra.mxu0 %v589
      %v734 = vpop.f32.mrf.mxu0
      %v735 = vadd.f32 %v454, %v734
      %v736 = vpop.f32.mrf.mxu0
      %v737 = vpop.f32.mrf.mxu0
      %v738 = vadd.f32 %v454, %v737
      %v739 = vpop.f32.mrf.mxu0
      %740 = vmatprep.mubr.bf16.mxu0 0
      %741 = vmatmul.mubr.bf16.gmra.mxu0 %v592
      %v742 = vpop.f32.mrf.mxu0
      %v743 = vadd.f32 %v454, %v742
      %v744 = vpop.f32.mrf.mxu0
      %v745 = vpop.f32.mrf.mxu0
      %v746 = vadd.f32 %v454, %v745
      %v747 = vpop.f32.mrf.mxu0
      %748 = vmatprep.mubr.bf16.mxu0 0
      %749 = vmatmul.mubr.bf16.gmra.mxu0 %v595
      %v750 = vpop.f32.mrf.mxu0
      %v751 = vadd.f32 %v454, %v750
      %v752 = vpop.f32.mrf.mxu0
      %v753 = vpop.f32.mrf.mxu0
      %v754 = vadd.f32 %v454, %v753
      %v755 = vpop.f32.mrf.mxu0
      %756 = vmatprep.mubr.bf16.mxu0 0
      %757 = vmatmul.mubr.bf16.gmra.mxu0 %v598
      %v758 = vpop.f32.mrf.mxu0
      %v759 = vadd.f32 %v454, %v758
      %v760 = vpop.f32.mrf.mxu0
      %v761 = vpop.f32.mrf.mxu0
      %v762 = vadd.f32 %v454, %v761
      %v763 = vpop.f32.mrf.mxu0
      %764 = vdwg.mxu0
      %v765 = vpack.c.bf16 %v642, %v639
      %v766 = vpack.c.bf16 %v650, %v647
      %v767 = vpack.c.bf16 %v658, %v655
      %v768 = vpack.c.bf16 %v666, %v663
      %v769 = vpack.c.bf16 %v674, %v671
      %v770 = vpack.c.bf16 %v682, %v679
      %v771 = vpack.c.bf16 %v690, %v687
      %v772 = vpack.c.bf16 %v698, %v695
      %v773 = vpack.c.bf16 %v706, %v703
      %v774 = vpack.c.bf16 %v714, %v711
      %v775 = vpack.c.bf16 %v722, %v719
      %v776 = vpack.c.bf16 %v730, %v727
      %v777 = vpack.c.bf16 %v738, %v735
      %v778 = vpack.c.bf16 %v746, %v743
      %v779 = vpack.c.bf16 %v754, %v751
      %v780 = vpack.c.bf16 %v762, %v759
      %v797 = vunpack.c.l.b16 %v765
      %v798 = vunpack.c.h.b16 %v765
      %v799 = vunpack.c.l.b16 %v766
      %v800 = vunpack.c.h.b16 %v766
      %v801 = vunpack.c.l.b16 %v767
      %v802 = vunpack.c.h.b16 %v767
      %v803 = vunpack.c.l.b16 %v768
      %v804 = vunpack.c.h.b16 %v768
      %v805 = vunpack.c.l.b16 %v769
      %v806 = vunpack.c.h.b16 %v769
      %v807 = vunpack.c.l.b16 %v770
      %v808 = vunpack.c.h.b16 %v770
      %v809 = vunpack.c.l.b16 %v771
      %v810 = vunpack.c.h.b16 %v771
      %v811 = vunpack.c.l.b16 %v772
      %v812 = vunpack.c.h.b16 %v772
      %v813 = vunpack.c.l.b16 %v773
      %v814 = vunpack.c.h.b16 %v773
      %v815 = vunpack.c.l.b16 %v774
      %v816 = vunpack.c.h.b16 %v774
      %v817 = vunpack.c.l.b16 %v775
      %v818 = vunpack.c.h.b16 %v775
      %v819 = vunpack.c.l.b16 %v776
      %v820 = vunpack.c.h.b16 %v776
      %v821 = vunpack.c.l.b16 %v777
      %v822 = vunpack.c.h.b16 %v777
      %v823 = vunpack.c.l.b16 %v778
      %v824 = vunpack.c.h.b16 %v778
      %v825 = vunpack.c.l.b16 %v779
      %v826 = vunpack.c.h.b16 %v779
      %v827 = vunpack.c.l.b16 %v780
      %v828 = vunpack.c.h.b16 %v780
      %v829 = vpack.c.b16 %v797, %v797
      %v830 = vpack.c.b16 %v798, %v798
      %v831 = vpack.c.b16 %v799, %v799
      %v832 = vpack.c.b16 %v800, %v800
      %v833 = vpack.c.b16 %v801, %v801
      %v834 = vpack.c.b16 %v802, %v802
      %v835 = vpack.c.b16 %v803, %v803
      %v836 = vpack.c.b16 %v804, %v804
      %v837 = vpack.c.b16 %v805, %v805
      %v838 = vpack.c.b16 %v806, %v806
      %v839 = vpack.c.b16 %v807, %v807
      %v840 = vpack.c.b16 %v808, %v808
      %v841 = vpack.c.b16 %v809, %v809
      %v842 = vpack.c.b16 %v810, %v810
      %v843 = vpack.c.b16 %v811, %v811
      %v844 = vpack.c.b16 %v812, %v812
      %v845 = vpack.c.b16 %v813, %v813
      %v846 = vpack.c.b16 %v814, %v814
      %v847 = vpack.c.b16 %v815, %v815
      %v848 = vpack.c.b16 %v816, %v816
      %v849 = vpack.c.b16 %v817, %v817
      %v850 = vpack.c.b16 %v818, %v818
      %v851 = vpack.c.b16 %v819, %v819
      %v852 = vpack.c.b16 %v820, %v820
      %v853 = vpack.c.b16 %v821, %v821
      %v854 = vpack.c.b16 %v822, %v822
      %v855 = vpack.c.b16 %v823, %v823
      %v856 = vpack.c.b16 %v824, %v824
      %v857 = vpack.c.b16 %v825, %v825
      %v858 = vpack.c.b16 %v826, %v826
      %v859 = vpack.c.b16 %v827, %v827
      %v860 = vpack.c.b16 %v828, %v828
      %893 = vst [vmem:[%s390] sm:$0xf] %v829
      %894 = vst [vmem:[%s390 + $0x4] sm:$0xf] %v830
      %895 = vst [vmem:[%s390 + $0x8] sm:$0xf] %v831
      %896 = vst [vmem:[%s390 + $0xc] sm:$0xf] %v832
      %897 = vst [vmem:[%s390 + $0x10] sm:$0xf] %v833
      %898 = vst [vmem:[%s390 + $0x14] sm:$0xf] %v834
      %899 = vst [vmem:[%s390 + $0x18] sm:$0xf] %v835
      %900 = vst [vmem:[%s390 + $0x1c] sm:$0xf] %v836
      %901 = vst [vmem:[%s390 + $0x20] sm:$0xf] %v837
      %902 = vst [vmem:[%s390 + $0x24] sm:$0xf] %v838
      %903 = vst [vmem:[%s390 + $0x28] sm:$0xf] %v839
      %904 = vst [vmem:[%s390 + $0x2c] sm:$0xf] %v840
      %905 = vst [vmem:[%s390 + $0x30] sm:$0xf] %v841
      %906 = vst [vmem:[%s390 + $0x34] sm:$0xf] %v842
      %907 = vst [vmem:[%s390 + $0x38] sm:$0xf] %v843
      %908 = vst [vmem:[%s390 + $0x3c] sm:$0xf] %v844
      %909 = vst [vmem:[%s390 + $0x40] sm:$0xf] %v845
      %910 = vst [vmem:[%s390 + $0x44] sm:$0xf] %v846
      %911 = vst [vmem:[%s390 + $0x48] sm:$0xf] %v847
      %912 = vst [vmem:[%s390 + $0x4c] sm:$0xf] %v848
      %913 = vst [vmem:[%s390 + $0x50] sm:$0xf] %v849
      %914 = vst [vmem:[%s390 + $0x54] sm:$0xf] %v850
      %915 = vst [vmem:[%s390 + $0x58] sm:$0xf] %v851
      %916 = vst [vmem:[%s390 + $0x5c] sm:$0xf] %v852
      %917 = vst [vmem:[%s390 + $0x60] sm:$0xf] %v853
      %918 = vst [vmem:[%s390 + $0x64] sm:$0xf] %v854
      %919 = vst [vmem:[%s390 + $0x68] sm:$0xf] %v855
      %920 = vst [vmem:[%s390 + $0x6c] sm:$0xf] %v856
      %921 = vst [vmem:[%s390 + $0x70] sm:$0xf] %v857
      %922 = vst [vmem:[%s390 + $0x74] sm:$0xf] %v858
      %923 = vst [vmem:[%s390 + $0x78] sm:$0xf] %v859
      %924 = vst [vmem:[%s390 + $0x7c] sm:$0xf] %v860
      %v925 = vadd.f32 %v639, %v642
      %v926 = vadd.f32 %v925, %v647
      %v927 = vadd.f32 %v926, %v650
      %v928 = vadd.f32 %v927, %v655
      %v929 = vadd.f32 %v928, %v658
      %v930 = vadd.f32 %v929, %v663
      %v931 = vadd.f32 %v930, %v666
      %v932 = vadd.f32 %v931, %v671
      %v933 = vadd.f32 %v932, %v674
      %v934 = vadd.f32 %v933, %v679
      %v935 = vadd.f32 %v934, %v682
      %v936 = vadd.f32 %v935, %v687
      %v937 = vadd.f32 %v936, %v690
      %v938 = vadd.f32 %v937, %v695
      %v939 = vadd.f32 %v938, %v698
      %v940 = vadd.f32 %v939, %v703
      %v941 = vadd.f32 %v940, %v706
      %v942 = vadd.f32 %v941, %v711
      %v943 = vadd.f32 %v942, %v714
      %v944 = vadd.f32 %v943, %v719
      %v945 = vadd.f32 %v944, %v722
      %v946 = vadd.f32 %v945, %v727
      %v947 = vadd.f32 %v946, %v730
      %v948 = vadd.f32 %v947, %v735
      %v949 = vadd.f32 %v948, %v738
      %v950 = vadd.f32 %v949, %v743
      %v951 = vadd.f32 %v950, %v746
      %v952 = vadd.f32 %v951, %v751
      %v953 = vadd.f32 %v952, %v754
      %v954 = vadd.f32 %v953, %v759
      %v955 = vadd.f32 %v954, %v762
      %v956 = vrot.slane %v955, 4
      %v957 = vadd.f32 %v955, %v956
      %v958 = vrot.slane %v957, 2
      %v959 = vadd.f32 %v957, %v958
      %v960 = vrot.slane %v959, 1
      %v961 = vadd.f32 %v959, %v960
      %v962 = vmul.f32 %v639, %v639
      %v963 = vmul.f32 %v642, %v642
      %v964 = vmul.f32 %v647, %v647
      %v965 = vmul.f32 %v650, %v650
      %v966 = vmul.f32 %v655, %v655
      %v967 = vmul.f32 %v658, %v658
      %v968 = vmul.f32 %v663, %v663
      %v969 = vmul.f32 %v666, %v666
      %v970 = vmul.f32 %v671, %v671
      %v971 = vmul.f32 %v674, %v674
      %v972 = vmul.f32 %v679, %v679
      %v973 = vmul.f32 %v682, %v682
      %v974 = vmul.f32 %v687, %v687
      %v975 = vmul.f32 %v690, %v690
      %v976 = vmul.f32 %v695, %v695
      %v977 = vmul.f32 %v698, %v698
      %v978 = vmul.f32 %v703, %v703
      %v979 = vmul.f32 %v706, %v706
      %v980 = vmul.f32 %v711, %v711
      %v981 = vmul.f32 %v714, %v714
      %v982 = vmul.f32 %v719, %v719
      %v983 = vmul.f32 %v722, %v722
      %v984 = vmul.f32 %v727, %v727
      %v985 = vmul.f32 %v730, %v730
      %v986 = vmul.f32 %v735, %v735
      %v987 = vmul.f32 %v738, %v738
      %v988 = vmul.f32 %v743, %v743
      %v989 = vmul.f32 %v746, %v746
      %v990 = vmul.f32 %v751, %v751
      %v991 = vmul.f32 %v754, %v754
      %v992 = vmul.f32 %v759, %v759
      %v993 = vmul.f32 %v762, %v762
      %v994 = vadd.f32 %v962, %v963
      %v995 = vadd.f32 %v994, %v964
      %v996 = vadd.f32 %v995, %v965
      %v997 = vadd.f32 %v996, %v966
      %v998 = vadd.f32 %v997, %v967
      %v999 = vadd.f32 %v998, %v968
      %v1000 = vadd.f32 %v999, %v969
      %v1001 = vadd.f32 %v1000, %v970
      %v1002 = vadd.f32 %v1001, %v971
      %v1003 = vadd.f32 %v1002, %v972
      %v1004 = vadd.f32 %v1003, %v973
      %v1005 = vadd.f32 %v1004, %v974
      %v1006 = vadd.f32 %v1005, %v975
      %v1007 = vadd.f32 %v1006, %v976
      %v1008 = vadd.f32 %v1007, %v977
      %v1009 = vadd.f32 %v1008, %v978
      %v1010 = vadd.f32 %v1009, %v979
      %v1011 = vadd.f32 %v1010, %v980
      %v1012 = vadd.f32 %v1011, %v981
      %v1013 = vadd.f32 %v1012, %v982
      %v1014 = vadd.f32 %v1013, %v983
      %v1015 = vadd.f32 %v1014, %v984
      %v1016 = vadd.f32 %v1015, %v985
      %v1017 = vadd.f32 %v1016, %v986
      %v1018 = vadd.f32 %v1017, %v987
      %v1019 = vadd.f32 %v1018, %v988
      %v1020 = vadd.f32 %v1019, %v989
      %v1021 = vadd.f32 %v1020, %v990
      %v1022 = vadd.f32 %v1021, %v991
      %v1023 = vadd.f32 %v1022, %v992
      %v1024 = vadd.f32 %v1023, %v993
      %v1025 = vrot.slane %v1024, 4
      %v1026 = vadd.f32 %v1024, %v1025
      %v1027 = vrot.slane %v1026, 2
      %v1028 = vadd.f32 %v1026, %v1027
      %v1029 = vrot.slane %v1028, 1
      %v1030 = vadd.f32 %v1028, %v1029
      %1031 = vst [vmem:[%s400] sm:$0xff] %v961
      %1032 = vst [vmem:[%s409] sm:$0xff] %v1030
      %s1033 = sadd.s32 %s23, %s25
      %s1034 = smul.u32 32, %s24
      %p1035 = scmp.lt.s32.totalorder %s1034, 63
      %s1036 = scalar_select %p1035, %s1034, 63
      %p1037 = scmp.lt.s32.totalorder %s1033, 0
      %s1038 = scalar_select %p1037, %s1033, 0
      %s1039 = sadd.s32 %s1038, %s1036
      %s1040 = smul.addr %s1039, 4
      %s1041 = scalar_lea.vmem %s3, %s1040
      %s1042 = sadd.s32 %s23, %s25
      %p1043 = scmp.lt.s32.totalorder %s24, 1
      %s1044 = scalar_select %p1043, %s24, 1
      %p1045 = scmp.lt.s32.totalorder %s1042, 0
      %s1046 = scalar_select %p1045, %s1042, 0
      %s1047 = sadd.s32 %s1046, %s1044
      %s1048 = smul.addr %s1047, 8
      %s1049 = scalar_lea.vmem %s4, %s1048
      %s1050 = sadd.s32 %s23, %s25
      %p1051 = scmp.lt.s32.totalorder %s24, 1
      %s1052 = scalar_select %p1051, %s24, 1
      %p1053 = scmp.lt.s32.totalorder %s1050, 0
      %s1054 = scalar_select %p1053, %s1050, 0
      %s1055 = sadd.s32 %s1054, %s1052
      %s1056 = smul.addr %s1055, 8
      %s1057 = scalar_lea.vmem %s5, %s1056
      // Predicated region
      $region33: #{dcnv2_forward.4} parent=31 // pred_check
        %p1058 = pneg %p153
      $region34: #{dcnv2_forward.4} parent=31 // pred_check_branch
        %1060 = sbr.rel (%p1058) target = $region36
      $region35: #{dcnv2_forward.4} parent=31 // pred_region
        %s1061 = sadd.s32 %s23, %s25
        %s1062 = smul.u32 32, %s24
      $region36: #{dcnv2_forward.4} parent=31 // pred_fallthru
        _
      // Predicated region
      $region37: #{dcnv2_forward.4} parent=31 // pred_check
        %p1063 = pneg %p183
      $region38: #{dcnv2_forward.4} parent=31 // pred_check_branch
        %1065 = sbr.rel (%p1063) target = $region40
      $region39: #{dcnv2_forward.4} parent=31 // pred_region
        %s1066 = sadd.s32 %s23, %s25
      $region40: #{dcnv2_forward.4} parent=31 // pred_fallthru
        _
      // Predicated region
      $region41: #{dcnv2_forward.4} parent=31 // pred_check
        %p1067 = pneg %p213
      $region42: #{dcnv2_forward.4} parent=31 // pred_check_branch
        %1069 = sbr.rel (%p1067) target = $region44
      $region43: #{dcnv2_forward.4} parent=31 // pred_region
        %s1070 = sadd.s32 %s23, %s25
      $region44: #{dcnv2_forward.4} parent=31 // pred_fallthru
        _
    $region32: #{dcnv2_forward.4} parent=5 // pred_fallthru
      _
    %p1071 = scmp.le.s32.totalorder 2, %s12
    // Predicated region
    $region45: #{dcnv2_forward.4} parent=5 // pred_check
      %p1072 = pneg %p1071
    $region46: #{dcnv2_forward.4} parent=5 // pred_check_branch
      %1074 = sbr.rel (%p1072) target = $region48
    $region47: #{dcnv2_forward.4} parent=5 // pred_region
      %s1075 = ssub.s32 %s12, 2
      // Predicated region
      $region49: #{dcnv2_forward.4} parent=47 // pred_check
        %p1076 = pneg %p159
      $region50: #{dcnv2_forward.4} parent=47 // pred_check_branch
        %1078 = sbr.rel (%p1076) target = $region52
      $region51: #{dcnv2_forward.4} parent=47 // pred_region
        %s1079 = sadd.s32 %s27, %s29
        %s1080 = smul.u32 32, %s28
        %p1081 = scmp.lt.s32.totalorder %s1080, 63
        %s1082 = scalar_select %p1081, %s1080, 63
        %p1083 = scmp.lt.s32.totalorder %s1079, 0
        %s1084 = scalar_select %p1083, %s1079, 0
        %s1085 = sadd.s32 %s1084, %s1082
        %s1086 = smul.addr %s1085, 4
        %s1087 = scalar_lea.vmem %s3, %s1086
      $region52: #{dcnv2_forward.4} parent=47 // pred_fallthru
        _
      // Predicated region
      $region53: #{dcnv2_forward.4} parent=47 // pred_check
        %p1088 = pneg %p189
      $region54: #{dcnv2_forward.4} parent=47 // pred_check_branch
        %1090 = sbr.rel (%p1088) target = $region56
      $region55: #{dcnv2_forward.4} parent=47 // pred_region
        %s1091 = sadd.s32 %s27, %s29
        %p1092 = scmp.lt.s32.totalorder %s28, 1
        %s1093 = scalar_select %p1092, %s28, 1
        %p1094 = scmp.lt.s32.totalorder %s1091, 0
        %s1095 = scalar_select %p1094, %s1091, 0
        %s1096 = sadd.s32 %s1095, %s1093
        %s1097 = smul.addr %s1096, 8
        %s1098 = scalar_lea.vmem %s4, %s1097
      $region56: #{dcnv2_forward.4} parent=47 // pred_fallthru
        _
      // Predicated region
      $region57: #{dcnv2_forward.4} parent=47 // pred_check
        %p1099 = pneg %p219
      $region58: #{dcnv2_forward.4} parent=47 // pred_check_branch
        %1101 = sbr.rel (%p1099) target = $region60
      $region59: #{dcnv2_forward.4} parent=47 // pred_region
        %s1102 = sadd.s32 %s27, %s29
        %p1103 = scmp.lt.s32.totalorder %s28, 1
        %s1104 = scalar_select %p1103, %s28, 1
        %p1105 = scmp.lt.s32.totalorder %s1102, 0
        %s1106 = scalar_select %p1105, %s1102, 0
        %s1107 = sadd.s32 %s1106, %s1104
        %s1108 = smul.addr %s1107, 8
        %s1109 = scalar_lea.vmem %s5, %s1108
      $region60: #{dcnv2_forward.4} parent=47 // pred_fallthru
        _
    $region48: #{dcnv2_forward.4} parent=5 // pred_fallthru
      _
  $region6: #{dcnv2_forward.4} parent=0 // loop_footer
    %s16 = sadd.s32 1, %s12
  $region7: #{dcnv2_forward.4} parent=0 // loop_footer_branch
    %11 = sbr.rel target = $region3
  $region8: #{dcnv2_forward.4} parent=0 // loop_exit
    _

// kernel: dcnv2_forward.5
$region0: #{dcnv2_forward.5}
  #allocation0 [shape = 'u32[]', space=smem, size = 0x4, offset = 0x4, fixed_abs, tag = 'smem constant byte address 0x4 - core index']
  #allocation1 [shape = 'u32[144,128]{1,0:T(1,128)}', space=vmem, size = 0x12000, scoped, tag = 'internal scratch']
  %s0 = inlined_call_operand.vmem [shape: bf16[512,128], index: 0, kind: input, shape index: {}]
  %s1 = inlined_call_operand.vmem [shape: f32[1,128], index: 1, kind: input, shape index: {}]
  %s2 = inlined_call_operand.vmem [shape: f32[1,128], index: 2, kind: input, shape index: {}]
  %s3 = inlined_call_operand.vmem [shape: f32[512,128], index: 3, kind: output, shape index: {}]
  %s4 = sld [smem:[#allocation0]]
  $region22: #{dcnv2_forward.5} parent=0
    _
  %s6 = ssub.s32 1, %s4
  %s7 = scalar_select 0, %s6, %s4
  // Predicated region
  $region2: #{dcnv2_forward.5} parent=0 // pred_check
    _
  $region3: #{dcnv2_forward.5} parent=0 // pred_check_branch
    %9 = sbr.rel (0) target = $region5
  $region4: #{dcnv2_forward.5} parent=0 // pred_region
    _
  $region5: #{dcnv2_forward.5} parent=0 // pred_fallthru
    _
  // Predicated region
  $region6: #{dcnv2_forward.5} parent=0 // pred_check
    _
  $region7: #{dcnv2_forward.5} parent=0 // pred_check_branch
    %11 = sbr.rel (0) target = $region9
  $region8: #{dcnv2_forward.5} parent=0 // pred_region
    _
  $region9: #{dcnv2_forward.5} parent=0 // pred_fallthru
    _
  // Predicated region
  $region10: #{dcnv2_forward.5} parent=0 // pred_check
    _
  $region11: #{dcnv2_forward.5} parent=0 // pred_check_branch
    %13 = sbr.rel (0) target = $region13
  $region12: #{dcnv2_forward.5} parent=0 // pred_region
    _
  $region13: #{dcnv2_forward.5} parent=0 // pred_fallthru
    _
  %v14 = vld [vmem:[%s0] sm:$0xf]
  %v15 = vld [vmem:[%s0 + $0x4] sm:$0xf]
  %v16 = vld [vmem:[%s0 + $0x8] sm:$0xf]
  %v17 = vld [vmem:[%s0 + $0xc] sm:$0xf]
  %v18 = vld [vmem:[%s0 + $0x10] sm:$0xf]
  %v19 = vld [vmem:[%s0 + $0x14] sm:$0xf]
  %v20 = vld [vmem:[%s0 + $0x18] sm:$0xf]
  %v21 = vld [vmem:[%s0 + $0x1c] sm:$0xf]
  %v22 = vld [vmem:[%s0 + $0x20] sm:$0xf]
  %v23 = vld [vmem:[%s0 + $0x24] sm:$0xf]
  %v24 = vld [vmem:[%s0 + $0x28] sm:$0xf]
  %v25 = vld [vmem:[%s0 + $0x2c] sm:$0xf]
  %v26 = vld [vmem:[%s0 + $0x30] sm:$0xf]
  %v27 = vld [vmem:[%s0 + $0x34] sm:$0xf]
  %v28 = vld [vmem:[%s0 + $0x38] sm:$0xf]
  %v29 = vld [vmem:[%s0 + $0x3c] sm:$0xf]
  %v30 = vld [vmem:[%s0 + $0x40] sm:$0xf]
  %v31 = vld [vmem:[%s0 + $0x44] sm:$0xf]
  %v32 = vld [vmem:[%s0 + $0x48] sm:$0xf]
  %v33 = vld [vmem:[%s0 + $0x4c] sm:$0xf]
  %v34 = vld [vmem:[%s0 + $0x50] sm:$0xf]
  %v35 = vld [vmem:[%s0 + $0x54] sm:$0xf]
  %v36 = vld [vmem:[%s0 + $0x58] sm:$0xf]
  %v37 = vld [vmem:[%s0 + $0x5c] sm:$0xf]
  %v38 = vld [vmem:[%s0 + $0x60] sm:$0xf]
  %v39 = vld [vmem:[%s0 + $0x64] sm:$0xf]
  %v40 = vld [vmem:[%s0 + $0x68] sm:$0xf]
  %v41 = vld [vmem:[%s0 + $0x6c] sm:$0xf]
  %v42 = vld [vmem:[%s0 + $0x70] sm:$0xf]
  %v43 = vld [vmem:[%s0 + $0x74] sm:$0xf]
  %v44 = vld [vmem:[%s0 + $0x78] sm:$0xf]
  %v45 = vld [vmem:[%s0 + $0x7c] sm:$0xf]
  %v46 = vld [vmem:[%s0 + $0x80] sm:$0xf]
  %v47 = vld [vmem:[%s0 + $0x84] sm:$0xf]
  %v48 = vld [vmem:[%s0 + $0x88] sm:$0xf]
  %v49 = vld [vmem:[%s0 + $0x8c] sm:$0xf]
  %v50 = vld [vmem:[%s0 + $0x90] sm:$0xf]
  %v51 = vld [vmem:[%s0 + $0x94] sm:$0xf]
  %v52 = vld [vmem:[%s0 + $0x98] sm:$0xf]
  %v53 = vld [vmem:[%s0 + $0x9c] sm:$0xf]
  %v54 = vld [vmem:[%s0 + $0xa0] sm:$0xf]
  %v55 = vld [vmem:[%s0 + $0xa4] sm:$0xf]
  %v56 = vld [vmem:[%s0 + $0xa8] sm:$0xf]
  %v57 = vld [vmem:[%s0 + $0xac] sm:$0xf]
  %v58 = vld [vmem:[%s0 + $0xb0] sm:$0xf]
  %v59 = vld [vmem:[%s0 + $0xb4] sm:$0xf]
  %v60 = vld [vmem:[%s0 + $0xb8] sm:$0xf]
  %v61 = vld [vmem:[%s0 + $0xbc] sm:$0xf]
  %v62 = vld [vmem:[%s0 + $0xc0] sm:$0xf]
  %v63 = vld [vmem:[%s0 + $0xc4] sm:$0xf]
  %v64 = vld [vmem:[%s0 + $0xc8] sm:$0xf]
  %v65 = vld [vmem:[%s0 + $0xcc] sm:$0xf]
  %v66 = vld [vmem:[%s0 + $0xd0] sm:$0xf]
  %v67 = vld [vmem:[%s0 + $0xd4] sm:$0xf]
  %v68 = vld [vmem:[%s0 + $0xd8] sm:$0xf]
  %v69 = vld [vmem:[%s0 + $0xdc] sm:$0xf]
  %v70 = vld [vmem:[%s0 + $0xe0] sm:$0xf]
  %v71 = vld [vmem:[%s0 + $0xe4] sm:$0xf]
  %v72 = vld [vmem:[%s0 + $0xe8] sm:$0xf]
  %v73 = vld [vmem:[%s0 + $0xec] sm:$0xf]
  %v74 = vld [vmem:[%s0 + $0xf0] sm:$0xf]
  %v75 = vld [vmem:[%s0 + $0xf4] sm:$0xf]
  %v76 = vld [vmem:[%s0 + $0xf8] sm:$0xf]
  %v77 = vld [vmem:[%s0 + $0xfc] sm:$0xf]
  %v78 = vunpack.c.l.bf16 %v14
  %v79 = vunpack.c.l.bf16 %v15
  %v80 = vunpack.c.l.bf16 %v16
  %v81 = vunpack.c.l.bf16 %v17
  %v82 = vunpack.c.l.bf16 %v18
  %v83 = vunpack.c.l.bf16 %v19
  %v84 = vunpack.c.l.bf16 %v20
  %v85 = vunpack.c.l.bf16 %v21
  %v86 = vunpack.c.l.bf16 %v22
  %v87 = vunpack.c.l.bf16 %v23
  %v88 = vunpack.c.l.bf16 %v24
  %v89 = vunpack.c.l.bf16 %v25
  %v90 = vunpack.c.l.bf16 %v26
  %v91 = vunpack.c.l.bf16 %v27
  %v92 = vunpack.c.l.bf16 %v28
  %v93 = vunpack.c.l.bf16 %v29
  %v94 = vunpack.c.l.bf16 %v30
  %v95 = vunpack.c.l.bf16 %v31
  %v96 = vunpack.c.l.bf16 %v32
  %v97 = vunpack.c.l.bf16 %v33
  %v98 = vunpack.c.l.bf16 %v34
  %v99 = vunpack.c.l.bf16 %v35
  %v100 = vunpack.c.l.bf16 %v36
  %v101 = vunpack.c.l.bf16 %v37
  %v102 = vunpack.c.l.bf16 %v38
  %v103 = vunpack.c.l.bf16 %v39
  %v104 = vunpack.c.l.bf16 %v40
  %v105 = vunpack.c.l.bf16 %v41
  %v106 = vunpack.c.l.bf16 %v42
  %v107 = vunpack.c.l.bf16 %v43
  %v108 = vunpack.c.l.bf16 %v44
  %v109 = vunpack.c.l.bf16 %v45
  %v110 = vunpack.c.l.bf16 %v46
  %v111 = vunpack.c.l.bf16 %v47
  %v112 = vunpack.c.l.bf16 %v48
  %v113 = vunpack.c.l.bf16 %v49
  %v114 = vunpack.c.l.bf16 %v50
  %v115 = vunpack.c.l.bf16 %v51
  %v116 = vunpack.c.l.bf16 %v52
  %v117 = vunpack.c.l.bf16 %v53
  %v118 = vunpack.c.l.bf16 %v54
  %v119 = vunpack.c.l.bf16 %v55
  %v120 = vunpack.c.l.bf16 %v56
  %v121 = vunpack.c.l.bf16 %v57
  %v122 = vunpack.c.l.bf16 %v58
  %v123 = vunpack.c.l.bf16 %v59
  %v124 = vunpack.c.l.bf16 %v60
  %v125 = vunpack.c.l.bf16 %v61
  %v126 = vunpack.c.l.bf16 %v62
  %v127 = vunpack.c.l.bf16 %v63
  %v128 = vunpack.c.l.bf16 %v64
  %v129 = vunpack.c.l.bf16 %v65
  %v130 = vunpack.c.l.bf16 %v66
  %v131 = vunpack.c.l.bf16 %v67
  %v132 = vunpack.c.l.bf16 %v68
  %v133 = vunpack.c.l.bf16 %v69
  %v134 = vunpack.c.l.bf16 %v70
  %v135 = vunpack.c.l.bf16 %v71
  %v136 = vunpack.c.l.bf16 %v72
  %v137 = vunpack.c.l.bf16 %v73
  %v138 = vunpack.c.l.bf16 %v74
  %v139 = vunpack.c.l.bf16 %v75
  %v140 = vunpack.c.l.bf16 %v76
  %v141 = vunpack.c.l.bf16 %v77
  %v142 = vld [vmem:[%s1] sm:$0x1]
  %v144 = vlaneseq
  %v145 = vshrl.u32 %v144, 7
  %v146 = vsub.s32 0, %v145
  %v147 = vrot.slane %v142, %v146
  %v149 = vmul.f32 %v78, %v147
  %v150 = vmul.f32 %v79, %v147
  %v151 = vmul.f32 %v80, %v147
  %v152 = vmul.f32 %v81, %v147
  %v153 = vmul.f32 %v82, %v147
  %v154 = vmul.f32 %v83, %v147
  %v155 = vmul.f32 %v84, %v147
  %v156 = vmul.f32 %v85, %v147
  %v157 = vmul.f32 %v86, %v147
  %v158 = vmul.f32 %v87, %v147
  %v159 = vmul.f32 %v88, %v147
  %v160 = vmul.f32 %v89, %v147
  %v161 = vmul.f32 %v90, %v147
  %v162 = vmul.f32 %v91, %v147
  %v163 = vmul.f32 %v92, %v147
  %v164 = vmul.f32 %v93, %v147
  %v165 = vmul.f32 %v94, %v147
  %v166 = vmul.f32 %v95, %v147
  %v167 = vmul.f32 %v96, %v147
  %v168 = vmul.f32 %v97, %v147
  %v169 = vmul.f32 %v98, %v147
  %v170 = vmul.f32 %v99, %v147
  %v171 = vmul.f32 %v100, %v147
  %v172 = vmul.f32 %v101, %v147
  %v173 = vmul.f32 %v102, %v147
  %v174 = vmul.f32 %v103, %v147
  %v175 = vmul.f32 %v104, %v147
  %v176 = vmul.f32 %v105, %v147
  %v177 = vmul.f32 %v106, %v147
  %v178 = vmul.f32 %v107, %v147
  %v179 = vmul.f32 %v108, %v147
  %v180 = vmul.f32 %v109, %v147
  %v181 = vmul.f32 %v110, %v147
  %v182 = vmul.f32 %v111, %v147
  %v183 = vmul.f32 %v112, %v147
  %v184 = vmul.f32 %v113, %v147
  %v185 = vmul.f32 %v114, %v147
  %v186 = vmul.f32 %v115, %v147
  %v187 = vmul.f32 %v116, %v147
  %v188 = vmul.f32 %v117, %v147
  %v189 = vmul.f32 %v118, %v147
  %v190 = vmul.f32 %v119, %v147
  %v191 = vmul.f32 %v120, %v147
  %v192 = vmul.f32 %v121, %v147
  %v193 = vmul.f32 %v122, %v147
  %v194 = vmul.f32 %v123, %v147
  %v195 = vmul.f32 %v124, %v147
  %v196 = vmul.f32 %v125, %v147
  %v197 = vmul.f32 %v126, %v147
  %v198 = vmul.f32 %v127, %v147
  %v199 = vmul.f32 %v128, %v147
  %v200 = vmul.f32 %v129, %v147
  %v201 = vmul.f32 %v130, %v147
  %v202 = vmul.f32 %v131, %v147
  %v203 = vmul.f32 %v132, %v147
  %v204 = vmul.f32 %v133, %v147
  %v205 = vmul.f32 %v134, %v147
  %v206 = vmul.f32 %v135, %v147
  %v207 = vmul.f32 %v136, %v147
  %v208 = vmul.f32 %v137, %v147
  %v209 = vmul.f32 %v138, %v147
  %v210 = vmul.f32 %v139, %v147
  %v211 = vmul.f32 %v140, %v147
  %v212 = vmul.f32 %v141, %v147
  %v213 = vld [vmem:[%s2] sm:$0x1]
  %v215 = vlaneseq
  %v216 = vshrl.u32 %v215, 7
  %v217 = vsub.s32 0, %v216
  %v218 = vrot.slane %v213, %v217
  %v220 = vadd.f32 %v149, %v218
  %v221 = vadd.f32 %v150, %v218
  %v222 = vadd.f32 %v151, %v218
  %v223 = vadd.f32 %v152, %v218
  %v224 = vadd.f32 %v153, %v218
  %v225 = vadd.f32 %v154, %v218
  %v226 = vadd.f32 %v155, %v218
  %v227 = vadd.f32 %v156, %v218
  %v228 = vadd.f32 %v157, %v218
  %v229 = vadd.f32 %v158, %v218
  %v230 = vadd.f32 %v159, %v218
  %v231 = vadd.f32 %v160, %v218
  %v232 = vadd.f32 %v161, %v218
  %v233 = vadd.f32 %v162, %v218
  %v234 = vadd.f32 %v163, %v218
  %v235 = vadd.f32 %v164, %v218
  %v236 = vadd.f32 %v165, %v218
  %v237 = vadd.f32 %v166, %v218
  %v238 = vadd.f32 %v167, %v218
  %v239 = vadd.f32 %v168, %v218
  %v240 = vadd.f32 %v169, %v218
  %v241 = vadd.f32 %v170, %v218
  %v242 = vadd.f32 %v171, %v218
  %v243 = vadd.f32 %v172, %v218
  %v244 = vadd.f32 %v173, %v218
  %v245 = vadd.f32 %v174, %v218
  %v246 = vadd.f32 %v175, %v218
  %v247 = vadd.f32 %v176, %v218
  %v248 = vadd.f32 %v177, %v218
  %v249 = vadd.f32 %v178, %v218
  %v250 = vadd.f32 %v179, %v218
  %v251 = vadd.f32 %v180, %v218
  %v252 = vadd.f32 %v181, %v218
  %v253 = vadd.f32 %v182, %v218
  %v254 = vadd.f32 %v183, %v218
  %v255 = vadd.f32 %v184, %v218
  %v256 = vadd.f32 %v185, %v218
  %v257 = vadd.f32 %v186, %v218
  %v258 = vadd.f32 %v187, %v218
  %v259 = vadd.f32 %v188, %v218
  %v260 = vadd.f32 %v189, %v218
  %v261 = vadd.f32 %v190, %v218
  %v262 = vadd.f32 %v191, %v218
  %v263 = vadd.f32 %v192, %v218
  %v264 = vadd.f32 %v193, %v218
  %v265 = vadd.f32 %v194, %v218
  %v266 = vadd.f32 %v195, %v218
  %v267 = vadd.f32 %v196, %v218
  %v268 = vadd.f32 %v197, %v218
  %v269 = vadd.f32 %v198, %v218
  %v270 = vadd.f32 %v199, %v218
  %v271 = vadd.f32 %v200, %v218
  %v272 = vadd.f32 %v201, %v218
  %v273 = vadd.f32 %v202, %v218
  %v274 = vadd.f32 %v203, %v218
  %v275 = vadd.f32 %v204, %v218
  %v276 = vadd.f32 %v205, %v218
  %v277 = vadd.f32 %v206, %v218
  %v278 = vadd.f32 %v207, %v218
  %v279 = vadd.f32 %v208, %v218
  %v280 = vadd.f32 %v209, %v218
  %v281 = vadd.f32 %v210, %v218
  %v282 = vadd.f32 %v211, %v218
  %v283 = vadd.f32 %v212, %v218
  %v284 = vsub.f32 0.0, %v220
  %v285 = vsub.f32 0.0, %v221
  %v286 = vsub.f32 0.0, %v222
  %v287 = vsub.f32 0.0, %v223
  %v288 = vsub.f32 0.0, %v224
  %v289 = vsub.f32 0.0, %v225
  %v290 = vsub.f32 0.0, %v226
  %v291 = vsub.f32 0.0, %v227
  %v292 = vsub.f32 0.0, %v228
  %v293 = vsub.f32 0.0, %v229
  %v294 = vsub.f32 0.0, %v230
  %v295 = vsub.f32 0.0, %v231
  %v296 = vsub.f32 0.0, %v232
  %v297 = vsub.f32 0.0, %v233
  %v298 = vsub.f32 0.0, %v234
  %v299 = vsub.f32 0.0, %v235
  %v300 = vsub.f32 0.0, %v236
  %v301 = vsub.f32 0.0, %v237
  %v302 = vsub.f32 0.0, %v238
  %v303 = vsub.f32 0.0, %v239
  %v304 = vsub.f32 0.0, %v240
  %v305 = vsub.f32 0.0, %v241
  %v306 = vsub.f32 0.0, %v242
  %v307 = vsub.f32 0.0, %v243
  %v308 = vsub.f32 0.0, %v244
  %v309 = vsub.f32 0.0, %v245
  %v310 = vsub.f32 0.0, %v246
  %v311 = vsub.f32 0.0, %v247
  %v312 = vsub.f32 0.0, %v248
  %v313 = vsub.f32 0.0, %v249
  %v314 = vsub.f32 0.0, %v250
  %v315 = vsub.f32 0.0, %v251
  %v316 = vsub.f32 0.0, %v252
  %v317 = vsub.f32 0.0, %v253
  %v318 = vsub.f32 0.0, %v254
  %v319 = vsub.f32 0.0, %v255
  %v320 = vsub.f32 0.0, %v256
  %v321 = vsub.f32 0.0, %v257
  %v322 = vsub.f32 0.0, %v258
  %v323 = vsub.f32 0.0, %v259
  %v324 = vsub.f32 0.0, %v260
  %v325 = vsub.f32 0.0, %v261
  %v326 = vsub.f32 0.0, %v262
  %v327 = vsub.f32 0.0, %v263
  %v328 = vsub.f32 0.0, %v264
  %v329 = vsub.f32 0.0, %v265
  %v330 = vsub.f32 0.0, %v266
  %v331 = vsub.f32 0.0, %v267
  %v332 = vsub.f32 0.0, %v268
  %v333 = vsub.f32 0.0, %v269
  %v334 = vsub.f32 0.0, %v270
  %v335 = vsub.f32 0.0, %v271
  %v336 = vsub.f32 0.0, %v272
  %v337 = vsub.f32 0.0, %v273
  %v338 = vsub.f32 0.0, %v274
  %v339 = vsub.f32 0.0, %v275
  %v340 = vsub.f32 0.0, %v276
  %v341 = vsub.f32 0.0, %v277
  %v342 = vsub.f32 0.0, %v278
  %v343 = vsub.f32 0.0, %v279
  %v344 = vsub.f32 0.0, %v280
  %v345 = vsub.f32 0.0, %v281
  %v346 = vsub.f32 0.0, %v282
  %v347 = vsub.f32 0.0, %v283
  %v348 = vmul.f32 %v284, 1.442695
  %v349 = vpow.pop %v348
  %v350 = vmul.f32 %v285, 1.442695
  %v351 = vpow.pop %v350
  %v352 = vmul.f32 %v286, 1.442695
  %v353 = vpow.pop %v352
  %v354 = vmul.f32 %v287, 1.442695
  %v355 = vpow.pop %v354
  %v356 = vmul.f32 %v288, 1.442695
  %v357 = vpow.pop %v356
  %v358 = vmul.f32 %v289, 1.442695
  %v359 = vpow.pop %v358
  %v360 = vmul.f32 %v290, 1.442695
  %v361 = vpow.pop %v360
  %v362 = vmul.f32 %v291, 1.442695
  %v363 = vpow.pop %v362
  %v364 = vmul.f32 %v292, 1.442695
  %v365 = vpow.pop %v364
  %v366 = vmul.f32 %v293, 1.442695
  %v367 = vpow.pop %v366
  %v368 = vmul.f32 %v294, 1.442695
  %v369 = vpow.pop %v368
  %v370 = vmul.f32 %v295, 1.442695
  %v371 = vpow.pop %v370
  %v372 = vmul.f32 %v296, 1.442695
  %v373 = vpow.pop %v372
  %v374 = vmul.f32 %v297, 1.442695
  %v375 = vpow.pop %v374
  %v376 = vmul.f32 %v298, 1.442695
  %v377 = vpow.pop %v376
  %v378 = vmul.f32 %v299, 1.442695
  %v379 = vpow.pop %v378
  %v380 = vmul.f32 %v300, 1.442695
  %v381 = vpow.pop %v380
  %v382 = vmul.f32 %v301, 1.442695
  %v383 = vpow.pop %v382
  %v384 = vmul.f32 %v302, 1.442695
  %v385 = vpow.pop %v384
  %v386 = vmul.f32 %v303, 1.442695
  %v387 = vpow.pop %v386
  %v388 = vmul.f32 %v304, 1.442695
  %v389 = vpow.pop %v388
  %v390 = vmul.f32 %v305, 1.442695
  %v391 = vpow.pop %v390
  %v392 = vmul.f32 %v306, 1.442695
  %v393 = vpow.pop %v392
  %v394 = vmul.f32 %v307, 1.442695
  %v395 = vpow.pop %v394
  %v396 = vmul.f32 %v308, 1.442695
  %v397 = vpow.pop %v396
  %v398 = vmul.f32 %v309, 1.442695
  %v399 = vpow.pop %v398
  %v400 = vmul.f32 %v310, 1.442695
  %v401 = vpow.pop %v400
  %v402 = vmul.f32 %v311, 1.442695
  %v403 = vpow.pop %v402
  %v404 = vmul.f32 %v312, 1.442695
  %v405 = vpow.pop %v404
  %v406 = vmul.f32 %v313, 1.442695
  %v407 = vpow.pop %v406
  %v408 = vmul.f32 %v314, 1.442695
  %v409 = vpow.pop %v408
  %v410 = vmul.f32 %v315, 1.442695
  %v411 = vpow.pop %v410
  %v412 = vmul.f32 %v316, 1.442695
  %v413 = vpow.pop %v412
  %v414 = vmul.f32 %v317, 1.442695
  %v415 = vpow.pop %v414
  %v416 = vmul.f32 %v318, 1.442695
  %v417 = vpow.pop %v416
  %v418 = vmul.f32 %v319, 1.442695
  %v419 = vpow.pop %v418
  %v420 = vmul.f32 %v320, 1.442695
  %v421 = vpow.pop %v420
  %v422 = vmul.f32 %v321, 1.442695
  %v423 = vpow.pop %v422
  %v424 = vmul.f32 %v322, 1.442695
  %v425 = vpow.pop %v424
  %v426 = vmul.f32 %v323, 1.442695
  %v427 = vpow.pop %v426
  %v428 = vmul.f32 %v324, 1.442695
  %v429 = vpow.pop %v428
  %v430 = vmul.f32 %v325, 1.442695
  %v431 = vpow.pop %v430
  %v432 = vmul.f32 %v326, 1.442695
  %v433 = vpow.pop %v432
  %v434 = vmul.f32 %v327, 1.442695
  %v435 = vpow.pop %v434
  %v436 = vmul.f32 %v328, 1.442695
  %v437 = vpow.pop %v436
  %v438 = vmul.f32 %v329, 1.442695
  %v439 = vpow.pop %v438
  %v440 = vmul.f32 %v330, 1.442695
  %v441 = vpow.pop %v440
  %v442 = vmul.f32 %v331, 1.442695
  %v443 = vpow.pop %v442
  %v444 = vmul.f32 %v332, 1.442695
  %v445 = vpow.pop %v444
  %v446 = vmul.f32 %v333, 1.442695
  %v447 = vpow.pop %v446
  %v448 = vmul.f32 %v334, 1.442695
  %v449 = vpow.pop %v448
  %v450 = vmul.f32 %v335, 1.442695
  %v451 = vpow.pop %v450
  %v452 = vmul.f32 %v336, 1.442695
  %v453 = vpow.pop %v452
  %v454 = vmul.f32 %v337, 1.442695
  %v455 = vpow.pop %v454
  %v456 = vmul.f32 %v338, 1.442695
  %v457 = vpow.pop %v456
  %v458 = vmul.f32 %v339, 1.442695
  %v459 = vpow.pop %v458
  %v460 = vmul.f32 %v340, 1.442695
  %v461 = vpow.pop %v460
  %v462 = vmul.f32 %v341, 1.442695
  %v463 = vpow.pop %v462
  %v464 = vmul.f32 %v342, 1.442695
  %v465 = vpow.pop %v464
  %v466 = vmul.f32 %v343, 1.442695
  %v467 = vpow.pop %v466
  %v468 = vmul.f32 %v344, 1.442695
  %v469 = vpow.pop %v468
  %v470 = vmul.f32 %v345, 1.442695
  %v471 = vpow.pop %v470
  %v472 = vmul.f32 %v346, 1.442695
  %v473 = vpow.pop %v472
  %v474 = vmul.f32 %v347, 1.442695
  %v475 = vpow.pop %v474
  %v476 = vadd.f32 %v349, 1.0
  %v477 = vadd.f32 %v351, 1.0
  %v478 = vadd.f32 %v353, 1.0
  %v479 = vadd.f32 %v355, 1.0
  %v480 = vadd.f32 %v357, 1.0
  %v481 = vadd.f32 %v359, 1.0
  %v482 = vadd.f32 %v361, 1.0
  %v483 = vadd.f32 %v363, 1.0
  %v484 = vadd.f32 %v365, 1.0
  %v485 = vadd.f32 %v367, 1.0
  %v486 = vadd.f32 %v369, 1.0
  %v487 = vadd.f32 %v371, 1.0
  %v488 = vadd.f32 %v373, 1.0
  %v489 = vadd.f32 %v375, 1.0
  %v490 = vadd.f32 %v377, 1.0
  %v491 = vadd.f32 %v379, 1.0
  %v492 = vadd.f32 %v381, 1.0
  %v493 = vadd.f32 %v383, 1.0
  %v494 = vadd.f32 %v385, 1.0
  %v495 = vadd.f32 %v387, 1.0
  %v496 = vadd.f32 %v389, 1.0
  %v497 = vadd.f32 %v391, 1.0
  %v498 = vadd.f32 %v393, 1.0
  %v499 = vadd.f32 %v395, 1.0
  %v500 = vadd.f32 %v397, 1.0
  %v501 = vadd.f32 %v399, 1.0
  %v502 = vadd.f32 %v401, 1.0
  %v503 = vadd.f32 %v403, 1.0
  %v504 = vadd.f32 %v405, 1.0
  %v505 = vadd.f32 %v407, 1.0
  %v506 = vadd.f32 %v409, 1.0
  %v507 = vadd.f32 %v411, 1.0
  %v508 = vadd.f32 %v413, 1.0
  %v509 = vadd.f32 %v415, 1.0
  %v510 = vadd.f32 %v417, 1.0
  %v511 = vadd.f32 %v419, 1.0
  %v512 = vadd.f32 %v421, 1.0
  %v513 = vadd.f32 %v423, 1.0
  %v514 = vadd.f32 %v425, 1.0
  %v515 = vadd.f32 %v427, 1.0
  %v516 = vadd.f32 %v429, 1.0
  %v517 = vadd.f32 %v431, 1.0
  %v518 = vadd.f32 %v433, 1.0
  %v519 = vadd.f32 %v435, 1.0
  %v520 = vadd.f32 %v437, 1.0
  %v521 = vadd.f32 %v439, 1.0
  %v522 = vadd.f32 %v441, 1.0
  %v523 = vadd.f32 %v443, 1.0
  %v524 = vadd.f32 %v445, 1.0
  %v525 = vadd.f32 %v447, 1.0
  %v526 = vadd.f32 %v449, 1.0
  %v527 = vadd.f32 %v451, 1.0
  %v528 = vadd.f32 %v453, 1.0
  %v529 = vadd.f32 %v455, 1.0
  %v530 = vadd.f32 %v457, 1.0
  %v531 = vadd.f32 %v459, 1.0
  %v532 = vadd.f32 %v461, 1.0
  %v533 = vadd.f32 %v463, 1.0
  %v534 = vadd.f32 %v465, 1.0
  %v535 = vadd.f32 %v467, 1.0
  %v536 = vadd.f32 %v469, 1.0
  %v537 = vadd.f32 %v471, 1.0
  %v538 = vadd.f32 %v473, 1.0
  %v539 = vadd.f32 %v475, 1.0
  %v540 = vrcp.pop %v476
  %v541 = vmul.f32 1.0, %v540
  %v542 = vrcp.pop %v477
  %v543 = vmul.f32 1.0, %v542
  %v544 = vrcp.pop %v478
  %v545 = vmul.f32 1.0, %v544
  %v546 = vrcp.pop %v479
  %v547 = vmul.f32 1.0, %v546
  %v548 = vrcp.pop %v480
  %v549 = vmul.f32 1.0, %v548
  %v550 = vrcp.pop %v481
  %v551 = vmul.f32 1.0, %v550
  %v552 = vrcp.pop %v482
  %v553 = vmul.f32 1.0, %v552
  %v554 = vrcp.pop %v483
  %v555 = vmul.f32 1.0, %v554
  %v556 = vrcp.pop %v484
  %v557 = vmul.f32 1.0, %v556
  %v558 = vrcp.pop %v485
  %v559 = vmul.f32 1.0, %v558
  %v560 = vrcp.pop %v486
  %v561 = vmul.f32 1.0, %v560
  %v562 = vrcp.pop %v487
  %v563 = vmul.f32 1.0, %v562
  %v564 = vrcp.pop %v488
  %v565 = vmul.f32 1.0, %v564
  %v566 = vrcp.pop %v489
  %v567 = vmul.f32 1.0, %v566
  %v568 = vrcp.pop %v490
  %v569 = vmul.f32 1.0, %v568
  %v570 = vrcp.pop %v491
  %v571 = vmul.f32 1.0, %v570
  %v572 = vrcp.pop %v492
  %v573 = vmul.f32 1.0, %v572
  %v574 = vrcp.pop %v493
  %v575 = vmul.f32 1.0, %v574
  %v576 = vrcp.pop %v494
  %v577 = vmul.f32 1.0, %v576
  %v578 = vrcp.pop %v495
  %v579 = vmul.f32 1.0, %v578
  %v580 = vrcp.pop %v496
  %v581 = vmul.f32 1.0, %v580
  %v582 = vrcp.pop %v497
  %v583 = vmul.f32 1.0, %v582
  %v584 = vrcp.pop %v498
  %v585 = vmul.f32 1.0, %v584
  %v586 = vrcp.pop %v499
  %v587 = vmul.f32 1.0, %v586
  %v588 = vrcp.pop %v500
  %v589 = vmul.f32 1.0, %v588
  %v590 = vrcp.pop %v501
  %v591 = vmul.f32 1.0, %v590
  %v592 = vrcp.pop %v502
  %v593 = vmul.f32 1.0, %v592
  %v594 = vrcp.pop %v503
  %v595 = vmul.f32 1.0, %v594
  %v596 = vrcp.pop %v504
  %v597 = vmul.f32 1.0, %v596
  %v598 = vrcp.pop %v505
  %v599 = vmul.f32 1.0, %v598
  %v600 = vrcp.pop %v506
  %v601 = vmul.f32 1.0, %v600
  %v602 = vrcp.pop %v507
  %v603 = vmul.f32 1.0, %v602
  %v604 = vrcp.pop %v508
  %v605 = vmul.f32 1.0, %v604
  %v606 = vrcp.pop %v509
  %v607 = vmul.f32 1.0, %v606
  %v608 = vrcp.pop %v510
  %v609 = vmul.f32 1.0, %v608
  %v610 = vrcp.pop %v511
  %v611 = vmul.f32 1.0, %v610
  %v612 = vrcp.pop %v512
  %v613 = vmul.f32 1.0, %v612
  %v614 = vrcp.pop %v513
  %v615 = vmul.f32 1.0, %v614
  %v616 = vrcp.pop %v514
  %v617 = vmul.f32 1.0, %v616
  %v618 = vrcp.pop %v515
  %v619 = vmul.f32 1.0, %v618
  %v620 = vrcp.pop %v516
  %v621 = vmul.f32 1.0, %v620
  %v622 = vrcp.pop %v517
  %v623 = vmul.f32 1.0, %v622
  %v624 = vrcp.pop %v518
  %v625 = vmul.f32 1.0, %v624
  %v626 = vrcp.pop %v519
  %v627 = vmul.f32 1.0, %v626
  %v628 = vrcp.pop %v520
  %v629 = vmul.f32 1.0, %v628
  %v630 = vrcp.pop %v521
  %v631 = vmul.f32 1.0, %v630
  %v632 = vrcp.pop %v522
  %v633 = vmul.f32 1.0, %v632
  %v634 = vrcp.pop %v523
  %v635 = vmul.f32 1.0, %v634
  %v636 = vrcp.pop %v524
  %v637 = vmul.f32 1.0, %v636
  %v638 = vrcp.pop %v525
  %v639 = vmul.f32 1.0, %v638
  %v640 = vrcp.pop %v526
  %v641 = vmul.f32 1.0, %v640
  %v642 = vrcp.pop %v527
  %v643 = vmul.f32 1.0, %v642
  %v644 = vrcp.pop %v528
  %v645 = vmul.f32 1.0, %v644
  %v646 = vrcp.pop %v529
  %v647 = vmul.f32 1.0, %v646
  %v648 = vrcp.pop %v530
  %v649 = vmul.f32 1.0, %v648
  %v650 = vrcp.pop %v531
  %v651 = vmul.f32 1.0, %v650
  %v652 = vrcp.pop %v532
  %v653 = vmul.f32 1.0, %v652
  %v654 = vrcp.pop %v533
  %v655 = vmul.f32 1.0, %v654
  %v656 = vrcp.pop %v534
  %v657 = vmul.f32 1.0, %v656
  %v658 = vrcp.pop %v535
  %v659 = vmul.f32 1.0, %v658
  %v660 = vrcp.pop %v536
  %v661 = vmul.f32 1.0, %v660
  %v662 = vrcp.pop %v537
  %v663 = vmul.f32 1.0, %v662
  %v664 = vrcp.pop %v538
  %v665 = vmul.f32 1.0, %v664
  %v666 = vrcp.pop %v539
  %v667 = vmul.f32 1.0, %v666
  %v668 = vmul.f32 %v220, %v541
  %v669 = vmul.f32 %v221, %v543
  %v670 = vmul.f32 %v222, %v545
  %v671 = vmul.f32 %v223, %v547
  %v672 = vmul.f32 %v224, %v549
  %v673 = vmul.f32 %v225, %v551
  %v674 = vmul.f32 %v226, %v553
  %v675 = vmul.f32 %v227, %v555
  %v676 = vmul.f32 %v228, %v557
  %v677 = vmul.f32 %v229, %v559
  %v678 = vmul.f32 %v230, %v561
  %v679 = vmul.f32 %v231, %v563
  %v680 = vmul.f32 %v232, %v565
  %v681 = vmul.f32 %v233, %v567
  %v682 = vmul.f32 %v234, %v569
  %v683 = vmul.f32 %v235, %v571
  %v684 = vmul.f32 %v236, %v573
  %v685 = vmul.f32 %v237, %v575
  %v686 = vmul.f32 %v238, %v577
  %v687 = vmul.f32 %v239, %v579
  %v688 = vmul.f32 %v240, %v581
  %v689 = vmul.f32 %v241, %v583
  %v690 = vmul.f32 %v242, %v585
  %v691 = vmul.f32 %v243, %v587
  %v692 = vmul.f32 %v244, %v589
  %v693 = vmul.f32 %v245, %v591
  %v694 = vmul.f32 %v246, %v593
  %v695 = vmul.f32 %v247, %v595
  %v696 = vmul.f32 %v248, %v597
  %v697 = vmul.f32 %v249, %v599
  %v698 = vmul.f32 %v250, %v601
  %v699 = vmul.f32 %v251, %v603
  %v700 = vmul.f32 %v252, %v605
  %v701 = vmul.f32 %v253, %v607
  %v702 = vmul.f32 %v254, %v609
  %v703 = vmul.f32 %v255, %v611
  %v704 = vmul.f32 %v256, %v613
  %v705 = vmul.f32 %v257, %v615
  %v706 = vmul.f32 %v258, %v617
  %v707 = vmul.f32 %v259, %v619
  %v708 = vmul.f32 %v260, %v621
  %v709 = vmul.f32 %v261, %v623
  %v710 = vmul.f32 %v262, %v625
  %v711 = vmul.f32 %v263, %v627
  %v712 = vmul.f32 %v264, %v629
  %v713 = vmul.f32 %v265, %v631
  %v714 = vmul.f32 %v266, %v633
  %v715 = vmul.f32 %v267, %v635
  %v716 = vmul.f32 %v268, %v637
  %v717 = vmul.f32 %v269, %v639
  %v718 = vmul.f32 %v270, %v641
  %v719 = vmul.f32 %v271, %v643
  %v720 = vmul.f32 %v272, %v645
  %v721 = vmul.f32 %v273, %v647
  %v722 = vmul.f32 %v274, %v649
  %v723 = vmul.f32 %v275, %v651
  %v724 = vmul.f32 %v276, %v653
  %v725 = vmul.f32 %v277, %v655
  %v726 = vmul.f32 %v278, %v657
  %v727 = vmul.f32 %v279, %v659
  %v728 = vmul.f32 %v280, %v661
  %v729 = vmul.f32 %v281, %v663
  %v730 = vmul.f32 %v282, %v665
  %v731 = vmul.f32 %v283, %v667
  %732 = vst [vmem:[%s3] sm:$0xff] %v668
  %733 = vst [vmem:[%s3 + $0x8] sm:$0xff] %v669
  %734 = vst [vmem:[%s3 + $0x10] sm:$0xff] %v670
  %735 = vst [vmem:[%s3 + $0x18] sm:$0xff] %v671
  %736 = vst [vmem:[%s3 + $0x20] sm:$0xff] %v672
  %737 = vst [vmem:[%s3 + $0x28] sm:$0xff] %v673
  %738 = vst [vmem:[%s3 + $0x30] sm:$0xff] %v674
  %739 = vst [vmem:[%s3 + $0x38] sm:$0xff] %v675
  %740 = vst [vmem:[%s3 + $0x40] sm:$0xff] %v676
  %741 = vst [vmem:[%s3 + $0x48] sm:$0xff] %v677
  %742 = vst [vmem:[%s3 + $0x50] sm:$0xff] %v678
  %743 = vst [vmem:[%s3 + $0x58] sm:$0xff] %v679
  %744 = vst [vmem:[%s3 + $0x60] sm:$0xff] %v680
  %745 = vst [vmem:[%s3 + $0x68] sm:$0xff] %v681
  %746 = vst [vmem:[%s3 + $0x70] sm:$0xff] %v682
  %747 = vst [vmem:[%s3 + $0x78] sm:$0xff] %v683
  %748 = vst [vmem:[%s3 + $0x80] sm:$0xff] %v684
  %749 = vst [vmem:[%s3 + $0x88] sm:$0xff] %v685
  %750 = vst [vmem:[%s3 + $0x90] sm:$0xff] %v686
  %751 = vst [vmem:[%s3 + $0x98] sm:$0xff] %v687
  %752 = vst [vmem:[%s3 + $0xa0] sm:$0xff] %v688
  %753 = vst [vmem:[%s3 + $0xa8] sm:$0xff] %v689
  %754 = vst [vmem:[%s3 + $0xb0] sm:$0xff] %v690
  %755 = vst [vmem:[%s3 + $0xb8] sm:$0xff] %v691
  %756 = vst [vmem:[%s3 + $0xc0] sm:$0xff] %v692
  %757 = vst [vmem:[%s3 + $0xc8] sm:$0xff] %v693
  %758 = vst [vmem:[%s3 + $0xd0] sm:$0xff] %v694
  %759 = vst [vmem:[%s3 + $0xd8] sm:$0xff] %v695
  %760 = vst [vmem:[%s3 + $0xe0] sm:$0xff] %v696
  %761 = vst [vmem:[%s3 + $0xe8] sm:$0xff] %v697
  %762 = vst [vmem:[%s3 + $0xf0] sm:$0xff] %v698
  %763 = vst [vmem:[%s3 + $0xf8] sm:$0xff] %v699
  %764 = vst [vmem:[%s3 + $0x100] sm:$0xff] %v700
  %765 = vst [vmem:[%s3 + $0x108] sm:$0xff] %v701
  %766 = vst [vmem:[%s3 + $0x110] sm:$0xff] %v702
  %767 = vst [vmem:[%s3 + $0x118] sm:$0xff] %v703
  %768 = vst [vmem:[%s3 + $0x120] sm:$0xff] %v704
  %769 = vst [vmem:[%s3 + $0x128] sm:$0xff] %v705
  %770 = vst [vmem:[%s3 + $0x130] sm:$0xff] %v706
  %771 = vst [vmem:[%s3 + $0x138] sm:$0xff] %v707
  %772 = vst [vmem:[%s3 + $0x140] sm:$0xff] %v708
  %773 = vst [vmem:[%s3 + $0x148] sm:$0xff] %v709
  %774 = vst [vmem:[%s3 + $0x150] sm:$0xff] %v710
  %775 = vst [vmem:[%s3 + $0x158] sm:$0xff] %v711
  %776 = vst [vmem:[%s3 + $0x160] sm:$0xff] %v712
  %777 = vst [vmem:[%s3 + $0x168] sm:$0xff] %v713
  %778 = vst [vmem:[%s3 + $0x170] sm:$0xff] %v714
  %779 = vst [vmem:[%s3 + $0x178] sm:$0xff] %v715
  %780 = vst [vmem:[%s3 + $0x180] sm:$0xff] %v716
  %781 = vst [vmem:[%s3 + $0x188] sm:$0xff] %v717
  %782 = vst [vmem:[%s3 + $0x190] sm:$0xff] %v718
  %783 = vst [vmem:[%s3 + $0x198] sm:$0xff] %v719
  %784 = vst [vmem:[%s3 + $0x1a0] sm:$0xff] %v720
  %785 = vst [vmem:[%s3 + $0x1a8] sm:$0xff] %v721
  %786 = vst [vmem:[%s3 + $0x1b0] sm:$0xff] %v722
  %787 = vst [vmem:[%s3 + $0x1b8] sm:$0xff] %v723
  %788 = vst [vmem:[%s3 + $0x1c0] sm:$0xff] %v724
  %789 = vst [vmem:[%s3 + $0x1c8] sm:$0xff] %v725
  %790 = vst [vmem:[%s3 + $0x1d0] sm:$0xff] %v726
  %791 = vst [vmem:[%s3 + $0x1d8] sm:$0xff] %v727
  %792 = vst [vmem:[%s3 + $0x1e0] sm:$0xff] %v728
  %793 = vst [vmem:[%s3 + $0x1e8] sm:$0xff] %v729
  %794 = vst [vmem:[%s3 + $0x1f0] sm:$0xff] %v730
  %795 = vst [vmem:[%s3 + $0x1f8] sm:$0xff] %v731
  // Predicated region
  $region14: #{dcnv2_forward.5} parent=0 // pred_check
    _
  $region15: #{dcnv2_forward.5} parent=0 // pred_check_branch
    %797 = sbr.rel (0) target = $region17
  $region16: #{dcnv2_forward.5} parent=0 // pred_region
    _
  $region17: #{dcnv2_forward.5} parent=0 // pred_fallthru
    _
  // Predicated region
  $region18: #{dcnv2_forward.5} parent=0 // pred_check
    _
  $region19: #{dcnv2_forward.5} parent=0 // pred_check_branch
    %799 = sbr.rel (0) target = $region21
  $region20: #{dcnv2_forward.5} parent=0 // pred_region
    _
  $region21: #{dcnv2_forward.5} parent=0 // pred_fallthru
    _

</llo_original>
